<compile_context>
chip_gen: v7x
topology: tpu7x:2x2x1
jax: 0.10.0
libtpu: 0.0.40
codegen_flags: <defaults>
</compile_context>

<pallas_src>
import jax
import jax.numpy as jnp
from jax.experimental import pallas as pl
from jax.experimental.pallas import tpu as pltpu  # noqa: F401  (TPU backend)

# ------------------------- model hyper-parameters -------------------------
INPUT_SHAPE = 16      # sequence length fed to the net
OUT_SHAPE = 8         # number of classes
NUM_LAYERS = 2        # conv layers per conv_block
KERNEL_SIZE = 3       # conv kernel size (odd -> "same" length)
CHANNEL_SIZE = 4      # channels produced by block1
BATCH = 2

PAD = KERNEL_SIZE // 2
MAX_POOL = 2
MAX_CHANNELS = 128
EPS = 1e-5
HIDDEN = 256


# ------------------------------ fused kernel -------------------------------
def fused_vgg3_kernel(
    x_ref,
    bn0_s_ref, bn0_t_ref,
    c1_w_ref, c1_b_ref,
    bn1_s_ref, bn1_t_ref,
    c2a_w_ref, c2a_b_ref,
    c2b_w_ref, c2b_b_ref,
    bn2_s_ref, bn2_t_ref,
    c3a_w_ref, c3a_b_ref,
    c3b_w_ref, c3b_b_ref,
    bn3_s_ref, bn3_t_ref,
    fc1_w_ref, fc1_b_ref,
    fc2_w_ref, fc2_b_ref,
    o_ref,
):
    f32 = jnp.float32

    def affine(h, s_ref, t_ref):
        # Inference BatchNorm as per-channel affine: y = x * scale + shift.
        return h * s_ref[...] + t_ref[...]

    def conv_relu(h, w_ref, b_ref):
        # "same" Conv1d + bias + ReLU via a single im2col matmul.
        # h: (L, Cin); w_ref: (K*Cin, Cout) host-prepared; b_ref: (1, Cout).
        L, cin = h.shape
        zpad = jnp.zeros((PAD, cin), f32)
        hp = jnp.concatenate([zpad, h, zpad], axis=0)                # (L+2P, Cin)
        cols = jnp.concatenate(
            [hp[k:k + L, :] for k in range(KERNEL_SIZE)], axis=1)    # (L, K*Cin)
        y = jnp.dot(cols, w_ref[...], preferred_element_type=f32) + b_ref[...]
        return jnp.maximum(y, 0.0)

    def maxpool2(h):
        # MaxPool1d(kernel=2, stride=2) along L — unrolled, no strided slicing.
        L = h.shape[0]
        assert L % MAX_POOL == 0, "MaxPool1d(2) expects even L here"
        rows = [
            jnp.maximum(h[2 * i:2 * i + 1, :], h[2 * i + 1:2 * i + 2, :])
            for i in range(L // MAX_POOL)
        ]
        return rows[0] if len(rows) == 1 else jnp.concatenate(rows, axis=0)

    c1_w = c1_w_ref[...]          # (K, C1)  (Cin == 1)

    for b in range(BATCH):        # B == 2, fully unrolled — no grid
        # ----- block1: BN(1) -> Conv(1->C1) -> ReLU -> MaxPool -> BN(C1) -----
        h = affine(x_ref[b].astype(f32), bn0_s_ref, bn0_t_ref)       # (16, 1)
        # Cin == 1: rank-1 conv on the VPU (broadcast FMA), skip the MXU.
        zpad = jnp.zeros((PAD, 1), f32)
        hp = jnp.concatenate([zpad, h, zpad], axis=0)                # (18, 1)
        acc = jnp.zeros((INPUT_SHAPE, CHANNEL_SIZE), f32) + c1_b_ref[...]
        for k in range(KERNEL_SIZE):
            acc = acc + hp[k:k + INPUT_SHAPE, :] * c1_w[k:k + 1, :]
        h = jnp.maximum(acc, 0.0)                                    # (16, 4)
        h = affine(maxpool2(h), bn1_s_ref, bn1_t_ref)                # (8, 4)

        # ----- block2: [Conv -> ReLU] x NUM_LAYERS -> MaxPool -> BN -----
        h = conv_relu(h, c2a_w_ref, c2a_b_ref)                       # (8, 8)
        h = conv_relu(h, c2b_w_ref, c2b_b_ref)                       # (8, 16)
        h = affine(maxpool2(h), bn2_s_ref, bn2_t_ref)                # (4, 16)

        # ----- block3 -----
        h = conv_relu(h, c3a_w_ref, c3a_b_ref)                       # (4, 32)
        h = conv_relu(h, c3b_w_ref, c3b_b_ref)                       # (4, 64)
        h = affine(maxpool2(h), bn3_s_ref, bn3_t_ref)                # (2, 64)

        # ----- classifier: Dropout(id) -> fc1 -> ReLU -> Dropout(id) -> fc2 --
        # PyTorch's C-major flatten is pre-folded into fc1_w's (L3, C3, 256)
        # layout, so the channels-last activation is consumed directly.
        y = fc1_b_ref[...]                                           # (1, 256)
        for l in range(h.shape[0]):
            y = y + jnp.dot(h[l:l + 1, :], fc1_w_ref[l],
                            preferred_element_type=f32)
        y = jnp.maximum(y, 0.0)
        y = jnp.dot(y, fc2_w_ref[...], preferred_element_type=f32) + fc2_b_ref[...]
        o_ref[pl.ds(b, 1), :] = y.astype(o_ref.dtype)                # (1, 8)


# --------------------------- host-side preparation ---------------------------
def _bn_scale_shift(p):
    scale = p["gamma"] / jnp.sqrt(p["var"] + EPS)
    shift = p["beta"] - p["mean"] * scale
    return scale, shift


def _im2col_weight(w_torch):
    # (Cout, Cin, K) -> (K*Cin, Cout): row index r = k*Cin + ci.
    cout, cin, k = w_torch.shape
    return jnp.transpose(w_torch, (2, 1, 0)).reshape(k * cin, cout)


@jax.jit
def forward_pallas(x, params):
    B = x.shape[0]

    s0, t0 = _bn_scale_shift(params["bn0"])
    s1, t1 = _bn_scale_shift(params["bn1"])
    s2, t2 = _bn_scale_shift(params["bn_block2"])
    s3, t3 = _bn_scale_shift(params["bn_block3"])

    c1_w, c1_b = params["conv1"]
    (c2a_w, c2a_b), (c2b_w, c2b_b) = params["block2_convs"]
    (c3a_w, c3a_b), (c3b_w, c3b_b) = params["block3_convs"]
    w1, b1 = params["fc1"]
    w2, b2 = params["fc2"]

    c3 = s3.shape[0]            # channels entering the classifier (64)
    l3 = w1.shape[1] // c3      # spatial positions entering the classifier (2)
    # Fold the PyTorch C-major flatten (flat = c*L3 + l) into fc1: (L3, C3, 256)
    w1p = jnp.transpose(w1.reshape(w1.shape[0], c3, l3), (2, 1, 0))

    args = (
        x.reshape(B, INPUT_SHAPE, 1),
        s0.reshape(1, 1), t0.reshape(1, 1),
        _im2col_weight(c1_w), c1_b.reshape(1, -1),     # (K, C1): Cin == 1
        s1.reshape(1, -1), t1.reshape(1, -1),
        _im2col_weight(c2a_w), c2a_b.reshape(1, -1),
        _im2col_weight(c2b_w), c2b_b.reshape(1, -1),
        s2.reshape(1, -1), t2.reshape(1, -1),
        _im2col_weight(c3a_w), c3a_b.reshape(1, -1),
        _im2col_weight(c3b_w), c3b_b.reshape(1, -1),
        s3.reshape(1, -1), t3.reshape(1, -1),
        w1p, b1.reshape(1, -1),
        w2.T, b2.reshape(1, -1),
    )
    # No grid: the whole (tiny) network runs in one kernel invocation with every
    # operand resident in VMEM (total < 1 MiB on any TPU generation).
    return pl.pallas_call(
        fused_vgg3_kernel,
        out_shape=jax.ShapeDtypeStruct((B, OUT_SHAPE), x.dtype),
    )(*args)


# ------------------------------ parameter setup -----------------------------
def build_params(key):
    keys = iter(jax.random.split(key, 64))

    def nxt():
        return next(keys)

    def conv_init(cin, cout):
        fan = cin * KERNEL_SIZE
        w = jax.random.normal(nxt(), (cout, cin, KERNEL_SIZE), jnp.float32) / jnp.sqrt(fan)
        b = 0.1 * jax.random.normal(nxt(), (cout,), jnp.float32)
        return w, b

    def bn_init(c):
        return dict(
            gamma=1.0 + 0.1 * jax.random.normal(nxt(), (c,), jnp.float32),
            beta=0.1 * jax.random.normal(nxt(), (c,), jnp.float32),
            mean=0.1 * jax.random.normal(nxt(), (c,), jnp.float32),
            var=jnp.abs(jax.random.normal(nxt(), (c,), jnp.float32)) + 0.5,
        )

    params = {}
    # block1: BN(1), Conv(1->channel_size), ReLU, MaxPool(2), BN(channel_size)
    params["bn0"] = bn_init(1)
    params["conv1"] = conv_init(1, CHANNEL_SIZE)
    params["bn1"] = bn_init(CHANNEL_SIZE)

    # block2 / block3: [Conv(c -> min(2c,128)), ReLU] * NUM_LAYERS, MaxPool(2), BN
    in_c = CHANNEL_SIZE
    for name in ("block2", "block3"):
        convs = []
        for _ in range(NUM_LAYERS):
            out_c = min(in_c * 2, MAX_CHANNELS)
            convs.append(conv_init(in_c, out_c))
            in_c = out_c
        params[name + "_convs"] = convs
        params["bn_" + name] = bn_init(in_c)

    # feature-count bookkeeping (mirrors the PyTorch __init__ arithmetic)
    nf = INPUT_SHAPE
    nf = (nf + 2 * PAD - (KERNEL_SIZE - 1)) // MAX_POOL
    for _ in range(2):
        for _ in range(NUM_LAYERS):
            nf = nf + 2 * PAD - (KERNEL_SIZE - 1)
        nf = nf // MAX_POOL
    flat = in_c * nf

    w1 = jax.random.normal(nxt(), (HIDDEN, flat), jnp.float32) / jnp.sqrt(flat)
    b1 = 0.1 * jax.random.normal(nxt(), (HIDDEN,), jnp.float32)
    w2 = jax.random.normal(nxt(), (OUT_SHAPE, HIDDEN), jnp.float32) / jnp.sqrt(float(HIDDEN))
    b2 = 0.1 * jax.random.normal(nxt(), (OUT_SHAPE,), jnp.float32)
    params["fc1"] = (w1, b1)
    params["fc2"] = (w2, b2)
    return params


# ------------------------------ pure-JAX reference ---------------------------
def forward_reference(x, params):
    """Pure-JAX reference in PyTorch NCL layout (for correctness checking)."""
    B = x.shape[0]
    h = x.reshape(B, 1, INPUT_SHAPE)

    def bn(h, p):
        g = p["gamma"][None, :, None]
        bt = p["beta"][None, :, None]
        m = p["mean"][None, :, None]
        v = p["var"][None, :, None]
        return (h - m) / jnp.sqrt(v + EPS) * g + bt

    def conv_relu(h, w, b):
        xp = jnp.pad(h, ((0, 0), (0, 0), (PAD, PAD)))
        K = w.shape[2]
        Lout = xp.shape[2] - (K - 1)
        out = jnp.zeros((h.shape[0], w.shape[0], Lout), jnp.float32) + b[None, :, None]
        for k in range(K):
            out = out + jnp.einsum(
                "oc,bcl->bol", w[:, :, k], xp[:, :, k:k + Lout],
                precision=jax.lax.Precision.HIGHEST)
        return jnp.maximum(out, 0.0)

    def pool(h):
        Bh, Ch, Lh = h.shape
        return h.reshape(Bh, Ch, Lh // 2, 2).max(axis=-1)

    h = bn(h, params["bn0"])
    w, b = params["conv1"]
    h = conv_relu(h, w, b)
    h = bn(pool(h), params["bn1"])
    for (w, b) in params["block2_convs"]:
        h = conv_relu(h, w, b)
    h = bn(pool(h), params["bn_block2"])
    for (w, b) in params["block3_convs"]:
        h = conv_relu(h, w, b)
    h = bn(pool(h), params["bn_block3"])

    h = h.reshape(B, -1)
    w1, b1 = params["fc1"]
    h = jnp.maximum(jnp.dot(h, w1.T, precision=jax.lax.Precision.HIGHEST) + b1[None, :], 0.0)
    w2, b2 = params["fc2"]
    return jnp.dot(h, w2.T, precision=jax.lax.Precision.HIGHEST) + b2[None, :]


# ------------------------------------ main -----------------------------------
if __name__ == "__main__":
    key = jax.random.PRNGKey(0)
    k_params, k_x = jax.random.split(key)
    params = build_params(k_params)
    x = jax.random.normal(k_x, (BATCH, INPUT_SHAPE), jnp.float32)

    out = jax.block_until_ready(forward_pallas(x, params))
    assert out.shape == (BATCH, OUT_SHAPE), out.shape

    ref = forward_reference(x, params)
    max_err = float(jnp.max(jnp.abs(out - ref)))
    assert max_err < 2e-2, f"Pallas output mismatch vs reference: max_err={max_err}"

    print("KERNEL_OK")
</pallas_src>

<mosaic_0001>
module attributes {stable_mosaic.version = 11 : i64} {
  func.func @fused_vgg3_kernel(%arg0: memref<2x16x1xf32, #tpu.memory_space<vmem>>, %arg1: memref<1x1xf32, #tpu.memory_space<vmem>>, %arg2: memref<1x1xf32, #tpu.memory_space<vmem>>, %arg3: memref<3x4xf32, #tpu.memory_space<vmem>>, %arg4: memref<1x4xf32, #tpu.memory_space<vmem>>, %arg5: memref<1x4xf32, #tpu.memory_space<vmem>>, %arg6: memref<1x4xf32, #tpu.memory_space<vmem>>, %arg7: memref<12x8xf32, #tpu.memory_space<vmem>>, %arg8: memref<1x8xf32, #tpu.memory_space<vmem>>, %arg9: memref<24x16xf32, #tpu.memory_space<vmem>>, %arg10: memref<1x16xf32, #tpu.memory_space<vmem>>, %arg11: memref<1x16xf32, #tpu.memory_space<vmem>>, %arg12: memref<1x16xf32, #tpu.memory_space<vmem>>, %arg13: memref<48x32xf32, #tpu.memory_space<vmem>>, %arg14: memref<1x32xf32, #tpu.memory_space<vmem>>, %arg15: memref<96x64xf32, #tpu.memory_space<vmem>>, %arg16: memref<1x64xf32, #tpu.memory_space<vmem>>, %arg17: memref<1x64xf32, #tpu.memory_space<vmem>>, %arg18: memref<1x64xf32, #tpu.memory_space<vmem>>, %arg19: memref<2x64x256xf32, #tpu.memory_space<vmem>>, %arg20: memref<1x256xf32, #tpu.memory_space<vmem>>, %arg21: memref<256x8xf32, #tpu.memory_space<vmem>>, %arg22: memref<1x8xf32, #tpu.memory_space<vmem>>, %arg23: memref<2x8xf32, #tpu.memory_space<vmem>>) attributes {dimension_semantics = [], scalar_prefetch = 0 : i64, scratch_operands = 0 : i64, tpu.core_type = #tpu.core_type<tc>} {
    %c0 = arith.constant 0 : index
    %c0_0 = arith.constant 0 : index
    %0 = vector.load %arg3[%c0, %c0_0] : memref<3x4xf32, #tpu.memory_space<vmem>>, vector<3x4xf32>
    %c0_1 = arith.constant 0 : index
    %c0_2 = arith.constant 0 : index
    %c0_3 = arith.constant 0 : index
    %1 = vector.load %arg0[%c0_1, %c0_2, %c0_3] : memref<2x16x1xf32, #tpu.memory_space<vmem>>, vector<1x16x1xf32>
    %2 = vector.shape_cast %1 : vector<1x16x1xf32> to vector<16x1xf32>
    %c0_4 = arith.constant 0 : index
    %c0_5 = arith.constant 0 : index
    %3 = vector.load %arg1[%c0_4, %c0_5] : memref<1x1xf32, #tpu.memory_space<vmem>>, vector<1x1xf32>
    %4 = vector.broadcast %3 : vector<1x1xf32> to vector<16x1xf32>
    %5 = arith.mulf %2, %4 : vector<16x1xf32>
    %c0_6 = arith.constant 0 : index
    %c0_7 = arith.constant 0 : index
    %6 = vector.load %arg2[%c0_6, %c0_7] : memref<1x1xf32, #tpu.memory_space<vmem>>, vector<1x1xf32>
    %7 = vector.broadcast %6 : vector<1x1xf32> to vector<16x1xf32>
    %8 = arith.addf %5, %7 : vector<16x1xf32>
    %cst = arith.constant 0.000000e+00 : f32
    %9 = vector.broadcast %cst : f32 to vector<1x1xf32>
    %10 = tpu.concatenate %9, %8, %9 in 0 : vector<1x1xf32>, vector<16x1xf32>, vector<1x1xf32> -> vector<18x1xf32>
    %cst_8 = arith.constant 0.000000e+00 : f32
    %11 = vector.broadcast %cst_8 : f32 to vector<16x4xf32>
    %c0_9 = arith.constant 0 : index
    %c0_10 = arith.constant 0 : index
    %12 = vector.load %arg4[%c0_9, %c0_10] : memref<1x4xf32, #tpu.memory_space<vmem>>, vector<1x4xf32>
    %13 = vector.broadcast %12 : vector<1x4xf32> to vector<16x4xf32>
    %14 = arith.addf %11, %13 : vector<16x4xf32>
    %15 = vector.extract_strided_slice %10 {offsets = [0, 0], sizes = [16, 1], strides = [1, 1]} : vector<18x1xf32> to vector<16x1xf32>
    %16 = vector.extract_strided_slice %0 {offsets = [0, 0], sizes = [1, 4], strides = [1, 1]} : vector<3x4xf32> to vector<1x4xf32>
    %17 = vector.broadcast %15 : vector<16x1xf32> to vector<16x4xf32>
    %18 = vector.broadcast %16 : vector<1x4xf32> to vector<16x4xf32>
    %19 = arith.mulf %17, %18 : vector<16x4xf32>
    %20 = arith.addf %14, %19 : vector<16x4xf32>
    %21 = vector.extract_strided_slice %10 {offsets = [1, 0], sizes = [16, 1], strides = [1, 1]} : vector<18x1xf32> to vector<16x1xf32>
    %22 = vector.extract_strided_slice %0 {offsets = [1, 0], sizes = [1, 4], strides = [1, 1]} : vector<3x4xf32> to vector<1x4xf32>
    %23 = vector.broadcast %21 : vector<16x1xf32> to vector<16x4xf32>
    %24 = vector.broadcast %22 : vector<1x4xf32> to vector<16x4xf32>
    %25 = arith.mulf %23, %24 : vector<16x4xf32>
    %26 = arith.addf %20, %25 : vector<16x4xf32>
    %27 = vector.extract_strided_slice %10 {offsets = [2, 0], sizes = [16, 1], strides = [1, 1]} : vector<18x1xf32> to vector<16x1xf32>
    %28 = vector.extract_strided_slice %0 {offsets = [2, 0], sizes = [1, 4], strides = [1, 1]} : vector<3x4xf32> to vector<1x4xf32>
    %29 = vector.broadcast %27 : vector<16x1xf32> to vector<16x4xf32>
    %30 = vector.broadcast %28 : vector<1x4xf32> to vector<16x4xf32>
    %31 = arith.mulf %29, %30 : vector<16x4xf32>
    %32 = arith.addf %26, %31 : vector<16x4xf32>
    %cst_11 = arith.constant 0.000000e+00 : f32
    %33 = vector.broadcast %cst_11 : f32 to vector<16x4xf32>
    %34 = arith.maximumf %32, %33 : vector<16x4xf32>
    %35 = vector.extract_strided_slice %34 {offsets = [0, 0], sizes = [1, 4], strides = [1, 1]} : vector<16x4xf32> to vector<1x4xf32>
    %36 = vector.extract_strided_slice %34 {offsets = [1, 0], sizes = [1, 4], strides = [1, 1]} : vector<16x4xf32> to vector<1x4xf32>
    %37 = arith.maximumf %35, %36 : vector<1x4xf32>
    %38 = vector.extract_strided_slice %34 {offsets = [2, 0], sizes = [1, 4], strides = [1, 1]} : vector<16x4xf32> to vector<1x4xf32>
    %39 = vector.extract_strided_slice %34 {offsets = [3, 0], sizes = [1, 4], strides = [1, 1]} : vector<16x4xf32> to vector<1x4xf32>
    %40 = arith.maximumf %38, %39 : vector<1x4xf32>
    %41 = vector.extract_strided_slice %34 {offsets = [4, 0], sizes = [1, 4], strides = [1, 1]} : vector<16x4xf32> to vector<1x4xf32>
    %42 = vector.extract_strided_slice %34 {offsets = [5, 0], sizes = [1, 4], strides = [1, 1]} : vector<16x4xf32> to vector<1x4xf32>
    %43 = arith.maximumf %41, %42 : vector<1x4xf32>
    %44 = vector.extract_strided_slice %34 {offsets = [6, 0], sizes = [1, 4], strides = [1, 1]} : vector<16x4xf32> to vector<1x4xf32>
    %45 = vector.extract_strided_slice %34 {offsets = [7, 0], sizes = [1, 4], strides = [1, 1]} : vector<16x4xf32> to vector<1x4xf32>
    %46 = arith.maximumf %44, %45 : vector<1x4xf32>
    %47 = vector.extract_strided_slice %34 {offsets = [8, 0], sizes = [1, 4], strides = [1, 1]} : vector<16x4xf32> to vector<1x4xf32>
    %48 = vector.extract_strided_slice %34 {offsets = [9, 0], sizes = [1, 4], strides = [1, 1]} : vector<16x4xf32> to vector<1x4xf32>
    %49 = arith.maximumf %47, %48 : vector<1x4xf32>
    %50 = vector.extract_strided_slice %34 {offsets = [10, 0], sizes = [1, 4], strides = [1, 1]} : vector<16x4xf32> to vector<1x4xf32>
    %51 = vector.extract_strided_slice %34 {offsets = [11, 0], sizes = [1, 4], strides = [1, 1]} : vector<16x4xf32> to vector<1x4xf32>
    %52 = arith.maximumf %50, %51 : vector<1x4xf32>
    %53 = vector.extract_strided_slice %34 {offsets = [12, 0], sizes = [1, 4], strides = [1, 1]} : vector<16x4xf32> to vector<1x4xf32>
    %54 = vector.extract_strided_slice %34 {offsets = [13, 0], sizes = [1, 4], strides = [1, 1]} : vector<16x4xf32> to vector<1x4xf32>
    %55 = arith.maximumf %53, %54 : vector<1x4xf32>
    %56 = vector.extract_strided_slice %34 {offsets = [14, 0], sizes = [1, 4], strides = [1, 1]} : vector<16x4xf32> to vector<1x4xf32>
    %57 = vector.extract_strided_slice %34 {offsets = [15, 0], sizes = [1, 4], strides = [1, 1]} : vector<16x4xf32> to vector<1x4xf32>
    %58 = arith.maximumf %56, %57 : vector<1x4xf32>
    %59 = tpu.concatenate %37, %40, %43, %46, %49, %52, %55, %58 in 0 : vector<1x4xf32>, vector<1x4xf32>, vector<1x4xf32>, vector<1x4xf32>, vector<1x4xf32>, vector<1x4xf32>, vector<1x4xf32>, vector<1x4xf32> -> vector<8x4xf32>
    %c0_12 = arith.constant 0 : index
    %c0_13 = arith.constant 0 : index
    %60 = vector.load %arg5[%c0_12, %c0_13] : memref<1x4xf32, #tpu.memory_space<vmem>>, vector<1x4xf32>
    %61 = vector.broadcast %60 : vector<1x4xf32> to vector<8x4xf32>
    %62 = arith.mulf %59, %61 : vector<8x4xf32>
    %c0_14 = arith.constant 0 : index
    %c0_15 = arith.constant 0 : index
    %63 = vector.load %arg6[%c0_14, %c0_15] : memref<1x4xf32, #tpu.memory_space<vmem>>, vector<1x4xf32>
    %64 = vector.broadcast %63 : vector<1x4xf32> to vector<8x4xf32>
    %65 = arith.addf %62, %64 : vector<8x4xf32>
    %cst_16 = arith.constant 0.000000e+00 : f32
    %66 = vector.broadcast %cst_16 : f32 to vector<1x4xf32>
    %67 = tpu.concatenate %66, %65, %66 in 0 : vector<1x4xf32>, vector<8x4xf32>, vector<1x4xf32> -> vector<10x4xf32>
    %68 = vector.extract_strided_slice %67 {offsets = [0, 0], sizes = [8, 4], strides = [1, 1]} : vector<10x4xf32> to vector<8x4xf32>
    %69 = vector.extract_strided_slice %67 {offsets = [1, 0], sizes = [8, 4], strides = [1, 1]} : vector<10x4xf32> to vector<8x4xf32>
    %70 = vector.extract_strided_slice %67 {offsets = [2, 0], sizes = [8, 4], strides = [1, 1]} : vector<10x4xf32> to vector<8x4xf32>
    %71 = tpu.concatenate %68, %69, %70 in 1 : vector<8x4xf32>, vector<8x4xf32>, vector<8x4xf32> -> vector<8x12xf32>
    %c0_17 = arith.constant 0 : index
    %c0_18 = arith.constant 0 : index
    %72 = vector.load %arg7[%c0_17, %c0_18] : memref<12x8xf32, #tpu.memory_space<vmem>>, vector<12x8xf32>
    %cst_19 = arith.constant dense<0.000000e+00> : vector<8x8xf32>
    %73 = tpu.matmul %71, %72, %cst_19 {dimension_numbers = #tpu.dot_dimension_numbers<[1], [0], [0], [1], [0, 0, 1, 1], [], []>} : vector<8x12xf32>, vector<12x8xf32>, vector<8x8xf32> -> vector<8x8xf32>
    %c0_20 = arith.constant 0 : index
    %c0_21 = arith.constant 0 : index
    %74 = vector.load %arg8[%c0_20, %c0_21] : memref<1x8xf32, #tpu.memory_space<vmem>>, vector<1x8xf32>
    %75 = vector.broadcast %74 : vector<1x8xf32> to vector<8x8xf32>
    %76 = arith.addf %73, %75 : vector<8x8xf32>
    %cst_22 = arith.constant 0.000000e+00 : f32
    %77 = vector.broadcast %cst_22 : f32 to vector<8x8xf32>
    %78 = arith.maximumf %76, %77 : vector<8x8xf32>
    %cst_23 = arith.constant 0.000000e+00 : f32
    %79 = vector.broadcast %cst_23 : f32 to vector<1x8xf32>
    %80 = tpu.concatenate %79, %78, %79 in 0 : vector<1x8xf32>, vector<8x8xf32>, vector<1x8xf32> -> vector<10x8xf32>
    %81 = vector.extract_strided_slice %80 {offsets = [0, 0], sizes = [8, 8], strides = [1, 1]} : vector<10x8xf32> to vector<8x8xf32>
    %82 = vector.extract_strided_slice %80 {offsets = [1, 0], sizes = [8, 8], strides = [1, 1]} : vector<10x8xf32> to vector<8x8xf32>
    %83 = vector.extract_strided_slice %80 {offsets = [2, 0], sizes = [8, 8], strides = [1, 1]} : vector<10x8xf32> to vector<8x8xf32>
    %84 = tpu.concatenate %81, %82, %83 in 1 : vector<8x8xf32>, vector<8x8xf32>, vector<8x8xf32> -> vector<8x24xf32>
    %c0_24 = arith.constant 0 : index
    %c0_25 = arith.constant 0 : index
    %85 = vector.load %arg9[%c0_24, %c0_25] : memref<24x16xf32, #tpu.memory_space<vmem>>, vector<24x16xf32>
    %cst_26 = arith.constant dense<0.000000e+00> : vector<8x16xf32>
    %86 = tpu.matmul %84, %85, %cst_26 {dimension_numbers = #tpu.dot_dimension_numbers<[1], [0], [0], [1], [0, 0, 1, 1], [], []>} : vector<8x24xf32>, vector<24x16xf32>, vector<8x16xf32> -> vector<8x16xf32>
    %c0_27 = arith.constant 0 : index
    %c0_28 = arith.constant 0 : index
    %87 = vector.load %arg10[%c0_27, %c0_28] : memref<1x16xf32, #tpu.memory_space<vmem>>, vector<1x16xf32>
    %88 = vector.broadcast %87 : vector<1x16xf32> to vector<8x16xf32>
    %89 = arith.addf %86, %88 : vector<8x16xf32>
    %cst_29 = arith.constant 0.000000e+00 : f32
    %90 = vector.broadcast %cst_29 : f32 to vector<8x16xf32>
    %91 = arith.maximumf %89, %90 : vector<8x16xf32>
    %92 = vector.extract_strided_slice %91 {offsets = [0, 0], sizes = [1, 16], strides = [1, 1]} : vector<8x16xf32> to vector<1x16xf32>
    %93 = vector.extract_strided_slice %91 {offsets = [1, 0], sizes = [1, 16], strides = [1, 1]} : vector<8x16xf32> to vector<1x16xf32>
    %94 = arith.maximumf %92, %93 : vector<1x16xf32>
    %95 = vector.extract_strided_slice %91 {offsets = [2, 0], sizes = [1, 16], strides = [1, 1]} : vector<8x16xf32> to vector<1x16xf32>
    %96 = vector.extract_strided_slice %91 {offsets = [3, 0], sizes = [1, 16], strides = [1, 1]} : vector<8x16xf32> to vector<1x16xf32>
    %97 = arith.maximumf %95, %96 : vector<1x16xf32>
    %98 = vector.extract_strided_slice %91 {offsets = [4, 0], sizes = [1, 16], strides = [1, 1]} : vector<8x16xf32> to vector<1x16xf32>
    %99 = vector.extract_strided_slice %91 {offsets = [5, 0], sizes = [1, 16], strides = [1, 1]} : vector<8x16xf32> to vector<1x16xf32>
    %100 = arith.maximumf %98, %99 : vector<1x16xf32>
    %101 = vector.extract_strided_slice %91 {offsets = [6, 0], sizes = [1, 16], strides = [1, 1]} : vector<8x16xf32> to vector<1x16xf32>
    %102 = vector.extract_strided_slice %91 {offsets = [7, 0], sizes = [1, 16], strides = [1, 1]} : vector<8x16xf32> to vector<1x16xf32>
    %103 = arith.maximumf %101, %102 : vector<1x16xf32>
    %104 = tpu.concatenate %94, %97, %100, %103 in 0 : vector<1x16xf32>, vector<1x16xf32>, vector<1x16xf32>, vector<1x16xf32> -> vector<4x16xf32>
    %c0_30 = arith.constant 0 : index
    %c0_31 = arith.constant 0 : index
    %105 = vector.load %arg11[%c0_30, %c0_31] : memref<1x16xf32, #tpu.memory_space<vmem>>, vector<1x16xf32>
    %106 = vector.broadcast %105 : vector<1x16xf32> to vector<4x16xf32>
    %107 = arith.mulf %104, %106 : vector<4x16xf32>
    %c0_32 = arith.constant 0 : index
    %c0_33 = arith.constant 0 : index
    %108 = vector.load %arg12[%c0_32, %c0_33] : memref<1x16xf32, #tpu.memory_space<vmem>>, vector<1x16xf32>
    %109 = vector.broadcast %108 : vector<1x16xf32> to vector<4x16xf32>
    %110 = arith.addf %107, %109 : vector<4x16xf32>
    %cst_34 = arith.constant 0.000000e+00 : f32
    %111 = vector.broadcast %cst_34 : f32 to vector<1x16xf32>
    %112 = tpu.concatenate %111, %110, %111 in 0 : vector<1x16xf32>, vector<4x16xf32>, vector<1x16xf32> -> vector<6x16xf32>
    %113 = vector.extract_strided_slice %112 {offsets = [0, 0], sizes = [4, 16], strides = [1, 1]} : vector<6x16xf32> to vector<4x16xf32>
    %114 = vector.extract_strided_slice %112 {offsets = [1, 0], sizes = [4, 16], strides = [1, 1]} : vector<6x16xf32> to vector<4x16xf32>
    %115 = vector.extract_strided_slice %112 {offsets = [2, 0], sizes = [4, 16], strides = [1, 1]} : vector<6x16xf32> to vector<4x16xf32>
    %116 = tpu.concatenate %113, %114, %115 in 1 : vector<4x16xf32>, vector<4x16xf32>, vector<4x16xf32> -> vector<4x48xf32>
    %c0_35 = arith.constant 0 : index
    %c0_36 = arith.constant 0 : index
    %117 = vector.load %arg13[%c0_35, %c0_36] : memref<48x32xf32, #tpu.memory_space<vmem>>, vector<48x32xf32>
    %cst_37 = arith.constant dense<0.000000e+00> : vector<4x32xf32>
    %118 = tpu.matmul %116, %117, %cst_37 {dimension_numbers = #tpu.dot_dimension_numbers<[1], [0], [0], [1], [0, 0, 1, 1], [], []>} : vector<4x48xf32>, vector<48x32xf32>, vector<4x32xf32> -> vector<4x32xf32>
    %c0_38 = arith.constant 0 : index
    %c0_39 = arith.constant 0 : index
    %119 = vector.load %arg14[%c0_38, %c0_39] : memref<1x32xf32, #tpu.memory_space<vmem>>, vector<1x32xf32>
    %120 = vector.broadcast %119 : vector<1x32xf32> to vector<4x32xf32>
    %121 = arith.addf %118, %120 : vector<4x32xf32>
    %cst_40 = arith.constant 0.000000e+00 : f32
    %122 = vector.broadcast %cst_40 : f32 to vector<4x32xf32>
    %123 = arith.maximumf %121, %122 : vector<4x32xf32>
    %cst_41 = arith.constant 0.000000e+00 : f32
    %124 = vector.broadcast %cst_41 : f32 to vector<1x32xf32>
    %125 = tpu.concatenate %124, %123, %124 in 0 : vector<1x32xf32>, vector<4x32xf32>, vector<1x32xf32> -> vector<6x32xf32>
    %126 = vector.extract_strided_slice %125 {offsets = [0, 0], sizes = [4, 32], strides = [1, 1]} : vector<6x32xf32> to vector<4x32xf32>
    %127 = vector.extract_strided_slice %125 {offsets = [1, 0], sizes = [4, 32], strides = [1, 1]} : vector<6x32xf32> to vector<4x32xf32>
    %128 = vector.extract_strided_slice %125 {offsets = [2, 0], sizes = [4, 32], strides = [1, 1]} : vector<6x32xf32> to vector<4x32xf32>
    %129 = tpu.concatenate %126, %127, %128 in 1 : vector<4x32xf32>, vector<4x32xf32>, vector<4x32xf32> -> vector<4x96xf32>
    %c0_42 = arith.constant 0 : index
    %c0_43 = arith.constant 0 : index
    %130 = vector.load %arg15[%c0_42, %c0_43] : memref<96x64xf32, #tpu.memory_space<vmem>>, vector<96x64xf32>
    %cst_44 = arith.constant dense<0.000000e+00> : vector<4x64xf32>
    %131 = tpu.matmul %129, %130, %cst_44 {dimension_numbers = #tpu.dot_dimension_numbers<[1], [0], [0], [1], [0, 0, 1, 1], [], []>} : vector<4x96xf32>, vector<96x64xf32>, vector<4x64xf32> -> vector<4x64xf32>
    %c0_45 = arith.constant 0 : index
    %c0_46 = arith.constant 0 : index
    %132 = vector.load %arg16[%c0_45, %c0_46] : memref<1x64xf32, #tpu.memory_space<vmem>>, vector<1x64xf32>
    %133 = vector.broadcast %132 : vector<1x64xf32> to vector<4x64xf32>
    %134 = arith.addf %131, %133 : vector<4x64xf32>
    %cst_47 = arith.constant 0.000000e+00 : f32
    %135 = vector.broadcast %cst_47 : f32 to vector<4x64xf32>
    %136 = arith.maximumf %134, %135 : vector<4x64xf32>
    %137 = vector.extract_strided_slice %136 {offsets = [0, 0], sizes = [1, 64], strides = [1, 1]} : vector<4x64xf32> to vector<1x64xf32>
    %138 = vector.extract_strided_slice %136 {offsets = [1, 0], sizes = [1, 64], strides = [1, 1]} : vector<4x64xf32> to vector<1x64xf32>
    %139 = arith.maximumf %137, %138 : vector<1x64xf32>
    %140 = vector.extract_strided_slice %136 {offsets = [2, 0], sizes = [1, 64], strides = [1, 1]} : vector<4x64xf32> to vector<1x64xf32>
    %141 = vector.extract_strided_slice %136 {offsets = [3, 0], sizes = [1, 64], strides = [1, 1]} : vector<4x64xf32> to vector<1x64xf32>
    %142 = arith.maximumf %140, %141 : vector<1x64xf32>
    %143 = tpu.concatenate %139, %142 in 0 : vector<1x64xf32>, vector<1x64xf32> -> vector<2x64xf32>
    %c0_48 = arith.constant 0 : index
    %c0_49 = arith.constant 0 : index
    %144 = vector.load %arg17[%c0_48, %c0_49] : memref<1x64xf32, #tpu.memory_space<vmem>>, vector<1x64xf32>
    %145 = vector.broadcast %144 : vector<1x64xf32> to vector<2x64xf32>
    %146 = arith.mulf %143, %145 : vector<2x64xf32>
    %c0_50 = arith.constant 0 : index
    %c0_51 = arith.constant 0 : index
    %147 = vector.load %arg18[%c0_50, %c0_51] : memref<1x64xf32, #tpu.memory_space<vmem>>, vector<1x64xf32>
    %148 = vector.broadcast %147 : vector<1x64xf32> to vector<2x64xf32>
    %149 = arith.addf %146, %148 : vector<2x64xf32>
    %c0_52 = arith.constant 0 : index
    %c0_53 = arith.constant 0 : index
    %150 = vector.load %arg20[%c0_52, %c0_53] : memref<1x256xf32, #tpu.memory_space<vmem>>, vector<1x256xf32>
    %151 = vector.extract_strided_slice %149 {offsets = [0, 0], sizes = [1, 64], strides = [1, 1]} : vector<2x64xf32> to vector<1x64xf32>
    %c0_54 = arith.constant 0 : index
    %c0_55 = arith.constant 0 : index
    %c0_56 = arith.constant 0 : index
    %152 = vector.load %arg19[%c0_54, %c0_55, %c0_56] : memref<2x64x256xf32, #tpu.memory_space<vmem>>, vector<1x64x256xf32>
    %153 = vector.shape_cast %152 : vector<1x64x256xf32> to vector<64x256xf32>
    %cst_57 = arith.constant dense<0.000000e+00> : vector<1x256xf32>
    %154 = tpu.matmul %151, %153, %cst_57 {dimension_numbers = #tpu.dot_dimension_numbers<[1], [0], [0], [1], [0, 0, 1, 1], [], []>} : vector<1x64xf32>, vector<64x256xf32>, vector<1x256xf32> -> vector<1x256xf32>
    %155 = arith.addf %150, %154 : vector<1x256xf32>
    %156 = vector.extract_strided_slice %149 {offsets = [1, 0], sizes = [1, 64], strides = [1, 1]} : vector<2x64xf32> to vector<1x64xf32>
    %c1 = arith.constant 1 : index
    %c0_58 = arith.constant 0 : index
    %c0_59 = arith.constant 0 : index
    %157 = vector.load %arg19[%c1, %c0_58, %c0_59] : memref<2x64x256xf32, #tpu.memory_space<vmem>>, vector<1x64x256xf32>
    %158 = vector.shape_cast %157 : vector<1x64x256xf32> to vector<64x256xf32>
    %cst_60 = arith.constant dense<0.000000e+00> : vector<1x256xf32>
    %159 = tpu.matmul %156, %158, %cst_60 {dimension_numbers = #tpu.dot_dimension_numbers<[1], [0], [0], [1], [0, 0, 1, 1], [], []>} : vector<1x64xf32>, vector<64x256xf32>, vector<1x256xf32> -> vector<1x256xf32>
    %160 = arith.addf %155, %159 : vector<1x256xf32>
    %cst_61 = arith.constant 0.000000e+00 : f32
    %161 = vector.broadcast %cst_61 : f32 to vector<1x256xf32>
    %162 = arith.maximumf %160, %161 : vector<1x256xf32>
    %c0_62 = arith.constant 0 : index
    %c0_63 = arith.constant 0 : index
    %163 = vector.load %arg21[%c0_62, %c0_63] : memref<256x8xf32, #tpu.memory_space<vmem>>, vector<256x8xf32>
    %cst_64 = arith.constant dense<0.000000e+00> : vector<1x8xf32>
    %164 = tpu.matmul %162, %163, %cst_64 {dimension_numbers = #tpu.dot_dimension_numbers<[1], [0], [0], [1], [0, 0, 1, 1], [], []>} : vector<1x256xf32>, vector<256x8xf32>, vector<1x8xf32> -> vector<1x8xf32>
    %c0_65 = arith.constant 0 : index
    %c0_66 = arith.constant 0 : index
    %165 = vector.load %arg22[%c0_65, %c0_66] : memref<1x8xf32, #tpu.memory_space<vmem>>, vector<1x8xf32>
    %166 = arith.addf %164, %165 : vector<1x8xf32>
    %c0_67 = arith.constant 0 : index
    %c0_68 = arith.constant 0 : index
    %167 = vector.load %arg23[%c0_67, %c0_68] : memref<2x8xf32, #tpu.memory_space<vmem>>, vector<1x8xf32>
    tpu.vector_store %arg23[%c0_67, %c0_68], %166 {strides = array<i32>} : memref<2x8xf32, #tpu.memory_space<vmem>>, vector<1x8xf32>,
    %c1_69 = arith.constant 1 : index
    %c0_70 = arith.constant 0 : index
    %c0_71 = arith.constant 0 : index
    %168 = vector.load %arg0[%c1_69, %c0_70, %c0_71] : memref<2x16x1xf32, #tpu.memory_space<vmem>>, vector<1x16x1xf32>
    %169 = vector.shape_cast %168 : vector<1x16x1xf32> to vector<16x1xf32>
    %c0_72 = arith.constant 0 : index
    %c0_73 = arith.constant 0 : index
    %170 = vector.load %arg1[%c0_72, %c0_73] : memref<1x1xf32, #tpu.memory_space<vmem>>, vector<1x1xf32>
    %171 = vector.broadcast %170 : vector<1x1xf32> to vector<16x1xf32>
    %172 = arith.mulf %169, %171 : vector<16x1xf32>
    %c0_74 = arith.constant 0 : index
    %c0_75 = arith.constant 0 : index
    %173 = vector.load %arg2[%c0_74, %c0_75] : memref<1x1xf32, #tpu.memory_space<vmem>>, vector<1x1xf32>
    %174 = vector.broadcast %173 : vector<1x1xf32> to vector<16x1xf32>
    %175 = arith.addf %172, %174 : vector<16x1xf32>
    %cst_76 = arith.constant 0.000000e+00 : f32
    %176 = vector.broadcast %cst_76 : f32 to vector<1x1xf32>
    %177 = tpu.concatenate %176, %175, %176 in 0 : vector<1x1xf32>, vector<16x1xf32>, vector<1x1xf32> -> vector<18x1xf32>
    %cst_77 = arith.constant 0.000000e+00 : f32
    %178 = vector.broadcast %cst_77 : f32 to vector<16x4xf32>
    %c0_78 = arith.constant 0 : index
    %c0_79 = arith.constant 0 : index
    %179 = vector.load %arg4[%c0_78, %c0_79] : memref<1x4xf32, #tpu.memory_space<vmem>>, vector<1x4xf32>
    %180 = vector.broadcast %179 : vector<1x4xf32> to vector<16x4xf32>
    %181 = arith.addf %178, %180 : vector<16x4xf32>
    %182 = vector.extract_strided_slice %177 {offsets = [0, 0], sizes = [16, 1], strides = [1, 1]} : vector<18x1xf32> to vector<16x1xf32>
    %183 = vector.extract_strided_slice %0 {offsets = [0, 0], sizes = [1, 4], strides = [1, 1]} : vector<3x4xf32> to vector<1x4xf32>
    %184 = vector.broadcast %182 : vector<16x1xf32> to vector<16x4xf32>
    %185 = vector.broadcast %183 : vector<1x4xf32> to vector<16x4xf32>
    %186 = arith.mulf %184, %185 : vector<16x4xf32>
    %187 = arith.addf %181, %186 : vector<16x4xf32>
    %188 = vector.extract_strided_slice %177 {offsets = [1, 0], sizes = [16, 1], strides = [1, 1]} : vector<18x1xf32> to vector<16x1xf32>
    %189 = vector.extract_strided_slice %0 {offsets = [1, 0], sizes = [1, 4], strides = [1, 1]} : vector<3x4xf32> to vector<1x4xf32>
    %190 = vector.broadcast %188 : vector<16x1xf32> to vector<16x4xf32>
    %191 = vector.broadcast %189 : vector<1x4xf32> to vector<16x4xf32>
    %192 = arith.mulf %190, %191 : vector<16x4xf32>
    %193 = arith.addf %187, %192 : vector<16x4xf32>
    %194 = vector.extract_strided_slice %177 {offsets = [2, 0], sizes = [16, 1], strides = [1, 1]} : vector<18x1xf32> to vector<16x1xf32>
    %195 = vector.extract_strided_slice %0 {offsets = [2, 0], sizes = [1, 4], strides = [1, 1]} : vector<3x4xf32> to vector<1x4xf32>
    %196 = vector.broadcast %194 : vector<16x1xf32> to vector<16x4xf32>
    %197 = vector.broadcast %195 : vector<1x4xf32> to vector<16x4xf32>
    %198 = arith.mulf %196, %197 : vector<16x4xf32>
    %199 = arith.addf %193, %198 : vector<16x4xf32>
    %cst_80 = arith.constant 0.000000e+00 : f32
    %200 = vector.broadcast %cst_80 : f32 to vector<16x4xf32>
    %201 = arith.maximumf %199, %200 : vector<16x4xf32>
    %202 = vector.extract_strided_slice %201 {offsets = [0, 0], sizes = [1, 4], strides = [1, 1]} : vector<16x4xf32> to vector<1x4xf32>
    %203 = vector.extract_strided_slice %201 {offsets = [1, 0], sizes = [1, 4], strides = [1, 1]} : vector<16x4xf32> to vector<1x4xf32>
    %204 = arith.maximumf %202, %203 : vector<1x4xf32>
    %205 = vector.extract_strided_slice %201 {offsets = [2, 0], sizes = [1, 4], strides = [1, 1]} : vector<16x4xf32> to vector<1x4xf32>
    %206 = vector.extract_strided_slice %201 {offsets = [3, 0], sizes = [1, 4], strides = [1, 1]} : vector<16x4xf32> to vector<1x4xf32>
    %207 = arith.maximumf %205, %206 : vector<1x4xf32>
    %208 = vector.extract_strided_slice %201 {offsets = [4, 0], sizes = [1, 4], strides = [1, 1]} : vector<16x4xf32> to vector<1x4xf32>
    %209 = vector.extract_strided_slice %201 {offsets = [5, 0], sizes = [1, 4], strides = [1, 1]} : vector<16x4xf32> to vector<1x4xf32>
    %210 = arith.maximumf %208, %209 : vector<1x4xf32>
    %211 = vector.extract_strided_slice %201 {offsets = [6, 0], sizes = [1, 4], strides = [1, 1]} : vector<16x4xf32> to vector<1x4xf32>
    %212 = vector.extract_strided_slice %201 {offsets = [7, 0], sizes = [1, 4], strides = [1, 1]} : vector<16x4xf32> to vector<1x4xf32>
    %213 = arith.maximumf %211, %212 : vector<1x4xf32>
    %214 = vector.extract_strided_slice %201 {offsets = [8, 0], sizes = [1, 4], strides = [1, 1]} : vector<16x4xf32> to vector<1x4xf32>
    %215 = vector.extract_strided_slice %201 {offsets = [9, 0], sizes = [1, 4], strides = [1, 1]} : vector<16x4xf32> to vector<1x4xf32>
    %216 = arith.maximumf %214, %215 : vector<1x4xf32>
    %217 = vector.extract_strided_slice %201 {offsets = [10, 0], sizes = [1, 4], strides = [1, 1]} : vector<16x4xf32> to vector<1x4xf32>
    %218 = vector.extract_strided_slice %201 {offsets = [11, 0], sizes = [1, 4], strides = [1, 1]} : vector<16x4xf32> to vector<1x4xf32>
    %219 = arith.maximumf %217, %218 : vector<1x4xf32>
    %220 = vector.extract_strided_slice %201 {offsets = [12, 0], sizes = [1, 4], strides = [1, 1]} : vector<16x4xf32> to vector<1x4xf32>
    %221 = vector.extract_strided_slice %201 {offsets = [13, 0], sizes = [1, 4], strides = [1, 1]} : vector<16x4xf32> to vector<1x4xf32>
    %222 = arith.maximumf %220, %221 : vector<1x4xf32>
    %223 = vector.extract_strided_slice %201 {offsets = [14, 0], sizes = [1, 4], strides = [1, 1]} : vector<16x4xf32> to vector<1x4xf32>
    %224 = vector.extract_strided_slice %201 {offsets = [15, 0], sizes = [1, 4], strides = [1, 1]} : vector<16x4xf32> to vector<1x4xf32>
    %225 = arith.maximumf %223, %224 : vector<1x4xf32>
    %226 = tpu.concatenate %204, %207, %210, %213, %216, %219, %222, %225 in 0 : vector<1x4xf32>, vector<1x4xf32>, vector<1x4xf32>, vector<1x4xf32>, vector<1x4xf32>, vector<1x4xf32>, vector<1x4xf32>, vector<1x4xf32> -> vector<8x4xf32>
    %c0_81 = arith.constant 0 : index
    %c0_82 = arith.constant 0 : index
    %227 = vector.load %arg5[%c0_81, %c0_82] : memref<1x4xf32, #tpu.memory_space<vmem>>, vector<1x4xf32>
    %228 = vector.broadcast %227 : vector<1x4xf32> to vector<8x4xf32>
    %229 = arith.mulf %226, %228 : vector<8x4xf32>
    %c0_83 = arith.constant 0 : index
    %c0_84 = arith.constant 0 : index
    %230 = vector.load %arg6[%c0_83, %c0_84] : memref<1x4xf32, #tpu.memory_space<vmem>>, vector<1x4xf32>
    %231 = vector.broadcast %230 : vector<1x4xf32> to vector<8x4xf32>
    %232 = arith.addf %229, %231 : vector<8x4xf32>
    %cst_85 = arith.constant 0.000000e+00 : f32
    %233 = vector.broadcast %cst_85 : f32 to vector<1x4xf32>
    %234 = tpu.concatenate %233, %232, %233 in 0 : vector<1x4xf32>, vector<8x4xf32>, vector<1x4xf32> -> vector<10x4xf32>
    %235 = vector.extract_strided_slice %234 {offsets = [0, 0], sizes = [8, 4], strides = [1, 1]} : vector<10x4xf32> to vector<8x4xf32>
    %236 = vector.extract_strided_slice %234 {offsets = [1, 0], sizes = [8, 4], strides = [1, 1]} : vector<10x4xf32> to vector<8x4xf32>
    %237 = vector.extract_strided_slice %234 {offsets = [2, 0], sizes = [8, 4], strides = [1, 1]} : vector<10x4xf32> to vector<8x4xf32>
    %238 = tpu.concatenate %235, %236, %237 in 1 : vector<8x4xf32>, vector<8x4xf32>, vector<8x4xf32> -> vector<8x12xf32>
    %c0_86 = arith.constant 0 : index
    %c0_87 = arith.constant 0 : index
    %239 = vector.load %arg7[%c0_86, %c0_87] : memref<12x8xf32, #tpu.memory_space<vmem>>, vector<12x8xf32>
    %cst_88 = arith.constant dense<0.000000e+00> : vector<8x8xf32>
    %240 = tpu.matmul %238, %239, %cst_88 {dimension_numbers = #tpu.dot_dimension_numbers<[1], [0], [0], [1], [0, 0, 1, 1], [], []>} : vector<8x12xf32>, vector<12x8xf32>, vector<8x8xf32> -> vector<8x8xf32>
    %c0_89 = arith.constant 0 : index
    %c0_90 = arith.constant 0 : index
    %241 = vector.load %arg8[%c0_89, %c0_90] : memref<1x8xf32, #tpu.memory_space<vmem>>, vector<1x8xf32>
    %242 = vector.broadcast %241 : vector<1x8xf32> to vector<8x8xf32>
    %243 = arith.addf %240, %242 : vector<8x8xf32>
    %cst_91 = arith.constant 0.000000e+00 : f32
    %244 = vector.broadcast %cst_91 : f32 to vector<8x8xf32>
    %245 = arith.maximumf %243, %244 : vector<8x8xf32>
    %cst_92 = arith.constant 0.000000e+00 : f32
    %246 = vector.broadcast %cst_92 : f32 to vector<1x8xf32>
    %247 = tpu.concatenate %246, %245, %246 in 0 : vector<1x8xf32>, vector<8x8xf32>, vector<1x8xf32> -> vector<10x8xf32>
    %248 = vector.extract_strided_slice %247 {offsets = [0, 0], sizes = [8, 8], strides = [1, 1]} : vector<10x8xf32> to vector<8x8xf32>
    %249 = vector.extract_strided_slice %247 {offsets = [1, 0], sizes = [8, 8], strides = [1, 1]} : vector<10x8xf32> to vector<8x8xf32>
    %250 = vector.extract_strided_slice %247 {offsets = [2, 0], sizes = [8, 8], strides = [1, 1]} : vector<10x8xf32> to vector<8x8xf32>
    %251 = tpu.concatenate %248, %249, %250 in 1 : vector<8x8xf32>, vector<8x8xf32>, vector<8x8xf32> -> vector<8x24xf32>
    %c0_93 = arith.constant 0 : index
    %c0_94 = arith.constant 0 : index
    %252 = vector.load %arg9[%c0_93, %c0_94] : memref<24x16xf32, #tpu.memory_space<vmem>>, vector<24x16xf32>
    %cst_95 = arith.constant dense<0.000000e+00> : vector<8x16xf32>
    %253 = tpu.matmul %251, %252, %cst_95 {dimension_numbers = #tpu.dot_dimension_numbers<[1], [0], [0], [1], [0, 0, 1, 1], [], []>} : vector<8x24xf32>, vector<24x16xf32>, vector<8x16xf32> -> vector<8x16xf32>
    %c0_96 = arith.constant 0 : index
    %c0_97 = arith.constant 0 : index
    %254 = vector.load %arg10[%c0_96, %c0_97] : memref<1x16xf32, #tpu.memory_space<vmem>>, vector<1x16xf32>
    %255 = vector.broadcast %254 : vector<1x16xf32> to vector<8x16xf32>
    %256 = arith.addf %253, %255 : vector<8x16xf32>
    %cst_98 = arith.constant 0.000000e+00 : f32
    %257 = vector.broadcast %cst_98 : f32 to vector<8x16xf32>
    %258 = arith.maximumf %256, %257 : vector<8x16xf32>
    %259 = vector.extract_strided_slice %258 {offsets = [0, 0], sizes = [1, 16], strides = [1, 1]} : vector<8x16xf32> to vector<1x16xf32>
    %260 = vector.extract_strided_slice %258 {offsets = [1, 0], sizes = [1, 16], strides = [1, 1]} : vector<8x16xf32> to vector<1x16xf32>
    %261 = arith.maximumf %259, %260 : vector<1x16xf32>
    %262 = vector.extract_strided_slice %258 {offsets = [2, 0], sizes = [1, 16], strides = [1, 1]} : vector<8x16xf32> to vector<1x16xf32>
    %263 = vector.extract_strided_slice %258 {offsets = [3, 0], sizes = [1, 16], strides = [1, 1]} : vector<8x16xf32> to vector<1x16xf32>
    %264 = arith.maximumf %262, %263 : vector<1x16xf32>
    %265 = vector.extract_strided_slice %258 {offsets = [4, 0], sizes = [1, 16], strides = [1, 1]} : vector<8x16xf32> to vector<1x16xf32>
    %266 = vector.extract_strided_slice %258 {offsets = [5, 0], sizes = [1, 16], strides = [1, 1]} : vector<8x16xf32> to vector<1x16xf32>
    %267 = arith.maximumf %265, %266 : vector<1x16xf32>
    %268 = vector.extract_strided_slice %258 {offsets = [6, 0], sizes = [1, 16], strides = [1, 1]} : vector<8x16xf32> to vector<1x16xf32>
    %269 = vector.extract_strided_slice %258 {offsets = [7, 0], sizes = [1, 16], strides = [1, 1]} : vector<8x16xf32> to vector<1x16xf32>
    %270 = arith.maximumf %268, %269 : vector<1x16xf32>
    %271 = tpu.concatenate %261, %264, %267, %270 in 0 : vector<1x16xf32>, vector<1x16xf32>, vector<1x16xf32>, vector<1x16xf32> -> vector<4x16xf32>
    %c0_99 = arith.constant 0 : index
    %c0_100 = arith.constant 0 : index
    %272 = vector.load %arg11[%c0_99, %c0_100] : memref<1x16xf32, #tpu.memory_space<vmem>>, vector<1x16xf32>
    %273 = vector.broadcast %272 : vector<1x16xf32> to vector<4x16xf32>
    %274 = arith.mulf %271, %273 : vector<4x16xf32>
    %c0_101 = arith.constant 0 : index
    %c0_102 = arith.constant 0 : index
    %275 = vector.load %arg12[%c0_101, %c0_102] : memref<1x16xf32, #tpu.memory_space<vmem>>, vector<1x16xf32>
    %276 = vector.broadcast %275 : vector<1x16xf32> to vector<4x16xf32>
    %277 = arith.addf %274, %276 : vector<4x16xf32>
    %cst_103 = arith.constant 0.000000e+00 : f32
    %278 = vector.broadcast %cst_103 : f32 to vector<1x16xf32>
    %279 = tpu.concatenate %278, %277, %278 in 0 : vector<1x16xf32>, vector<4x16xf32>, vector<1x16xf32> -> vector<6x16xf32>
    %280 = vector.extract_strided_slice %279 {offsets = [0, 0], sizes = [4, 16], strides = [1, 1]} : vector<6x16xf32> to vector<4x16xf32>
    %281 = vector.extract_strided_slice %279 {offsets = [1, 0], sizes = [4, 16], strides = [1, 1]} : vector<6x16xf32> to vector<4x16xf32>
    %282 = vector.extract_strided_slice %279 {offsets = [2, 0], sizes = [4, 16], strides = [1, 1]} : vector<6x16xf32> to vector<4x16xf32>
    %283 = tpu.concatenate %280, %281, %282 in 1 : vector<4x16xf32>, vector<4x16xf32>, vector<4x16xf32> -> vector<4x48xf32>
    %c0_104 = arith.constant 0 : index
    %c0_105 = arith.constant 0 : index
    %284 = vector.load %arg13[%c0_104, %c0_105] : memref<48x32xf32, #tpu.memory_space<vmem>>, vector<48x32xf32>
    %cst_106 = arith.constant dense<0.000000e+00> : vector<4x32xf32>
    %285 = tpu.matmul %283, %284, %cst_106 {dimension_numbers = #tpu.dot_dimension_numbers<[1], [0], [0], [1], [0, 0, 1, 1], [], []>} : vector<4x48xf32>, vector<48x32xf32>, vector<4x32xf32> -> vector<4x32xf32>
    %c0_107 = arith.constant 0 : index
    %c0_108 = arith.constant 0 : index
    %286 = vector.load %arg14[%c0_107, %c0_108] : memref<1x32xf32, #tpu.memory_space<vmem>>, vector<1x32xf32>
    %287 = vector.broadcast %286 : vector<1x32xf32> to vector<4x32xf32>
    %288 = arith.addf %285, %287 : vector<4x32xf32>
    %cst_109 = arith.constant 0.000000e+00 : f32
    %289 = vector.broadcast %cst_109 : f32 to vector<4x32xf32>
    %290 = arith.maximumf %288, %289 : vector<4x32xf32>
    %cst_110 = arith.constant 0.000000e+00 : f32
    %291 = vector.broadcast %cst_110 : f32 to vector<1x32xf32>
    %292 = tpu.concatenate %291, %290, %291 in 0 : vector<1x32xf32>, vector<4x32xf32>, vector<1x32xf32> -> vector<6x32xf32>
    %293 = vector.extract_strided_slice %292 {offsets = [0, 0], sizes = [4, 32], strides = [1, 1]} : vector<6x32xf32> to vector<4x32xf32>
    %294 = vector.extract_strided_slice %292 {offsets = [1, 0], sizes = [4, 32], strides = [1, 1]} : vector<6x32xf32> to vector<4x32xf32>
    %295 = vector.extract_strided_slice %292 {offsets = [2, 0], sizes = [4, 32], strides = [1, 1]} : vector<6x32xf32> to vector<4x32xf32>
    %296 = tpu.concatenate %293, %294, %295 in 1 : vector<4x32xf32>, vector<4x32xf32>, vector<4x32xf32> -> vector<4x96xf32>
    %c0_111 = arith.constant 0 : index
    %c0_112 = arith.constant 0 : index
    %297 = vector.load %arg15[%c0_111, %c0_112] : memref<96x64xf32, #tpu.memory_space<vmem>>, vector<96x64xf32>
    %cst_113 = arith.constant dense<0.000000e+00> : vector<4x64xf32>
    %298 = tpu.matmul %296, %297, %cst_113 {dimension_numbers = #tpu.dot_dimension_numbers<[1], [0], [0], [1], [0, 0, 1, 1], [], []>} : vector<4x96xf32>, vector<96x64xf32>, vector<4x64xf32> -> vector<4x64xf32>
    %c0_114 = arith.constant 0 : index
    %c0_115 = arith.constant 0 : index
    %299 = vector.load %arg16[%c0_114, %c0_115] : memref<1x64xf32, #tpu.memory_space<vmem>>, vector<1x64xf32>
    %300 = vector.broadcast %299 : vector<1x64xf32> to vector<4x64xf32>
    %301 = arith.addf %298, %300 : vector<4x64xf32>
    %cst_116 = arith.constant 0.000000e+00 : f32
    %302 = vector.broadcast %cst_116 : f32 to vector<4x64xf32>
    %303 = arith.maximumf %301, %302 : vector<4x64xf32>
    %304 = vector.extract_strided_slice %303 {offsets = [0, 0], sizes = [1, 64], strides = [1, 1]} : vector<4x64xf32> to vector<1x64xf32>
    %305 = vector.extract_strided_slice %303 {offsets = [1, 0], sizes = [1, 64], strides = [1, 1]} : vector<4x64xf32> to vector<1x64xf32>
    %306 = arith.maximumf %304, %305 : vector<1x64xf32>
    %307 = vector.extract_strided_slice %303 {offsets = [2, 0], sizes = [1, 64], strides = [1, 1]} : vector<4x64xf32> to vector<1x64xf32>
    %308 = vector.extract_strided_slice %303 {offsets = [3, 0], sizes = [1, 64], strides = [1, 1]} : vector<4x64xf32> to vector<1x64xf32>
    %309 = arith.maximumf %307, %308 : vector<1x64xf32>
    %310 = tpu.concatenate %306, %309 in 0 : vector<1x64xf32>, vector<1x64xf32> -> vector<2x64xf32>
    %c0_117 = arith.constant 0 : index
    %c0_118 = arith.constant 0 : index
    %311 = vector.load %arg17[%c0_117, %c0_118] : memref<1x64xf32, #tpu.memory_space<vmem>>, vector<1x64xf32>
    %312 = vector.broadcast %311 : vector<1x64xf32> to vector<2x64xf32>
    %313 = arith.mulf %310, %312 : vector<2x64xf32>
    %c0_119 = arith.constant 0 : index
    %c0_120 = arith.constant 0 : index
    %314 = vector.load %arg18[%c0_119, %c0_120] : memref<1x64xf32, #tpu.memory_space<vmem>>, vector<1x64xf32>
    %315 = vector.broadcast %314 : vector<1x64xf32> to vector<2x64xf32>
    %316 = arith.addf %313, %315 : vector<2x64xf32>
    %c0_121 = arith.constant 0 : index
    %c0_122 = arith.constant 0 : index
    %317 = vector.load %arg20[%c0_121, %c0_122] : memref<1x256xf32, #tpu.memory_space<vmem>>, vector<1x256xf32>
    %318 = vector.extract_strided_slice %316 {offsets = [0, 0], sizes = [1, 64], strides = [1, 1]} : vector<2x64xf32> to vector<1x64xf32>
    %c0_123 = arith.constant 0 : index
    %c0_124 = arith.constant 0 : index
    %c0_125 = arith.constant 0 : index
    %319 = vector.load %arg19[%c0_123, %c0_124, %c0_125] : memref<2x64x256xf32, #tpu.memory_space<vmem>>, vector<1x64x256xf32>
    %320 = vector.shape_cast %319 : vector<1x64x256xf32> to vector<64x256xf32>
    %cst_126 = arith.constant dense<0.000000e+00> : vector<1x256xf32>
    %321 = tpu.matmul %318, %320, %cst_126 {dimension_numbers = #tpu.dot_dimension_numbers<[1], [0], [0], [1], [0, 0, 1, 1], [], []>} : vector<1x64xf32>, vector<64x256xf32>, vector<1x256xf32> -> vector<1x256xf32>
    %322 = arith.addf %317, %321 : vector<1x256xf32>
    %323 = vector.extract_strided_slice %316 {offsets = [1, 0], sizes = [1, 64], strides = [1, 1]} : vector<2x64xf32> to vector<1x64xf32>
    %c1_127 = arith.constant 1 : index
    %c0_128 = arith.constant 0 : index
    %c0_129 = arith.constant 0 : index
    %324 = vector.load %arg19[%c1_127, %c0_128, %c0_129] : memref<2x64x256xf32, #tpu.memory_space<vmem>>, vector<1x64x256xf32>
    %325 = vector.shape_cast %324 : vector<1x64x256xf32> to vector<64x256xf32>
    %cst_130 = arith.constant dense<0.000000e+00> : vector<1x256xf32>
    %326 = tpu.matmul %323, %325, %cst_130 {dimension_numbers = #tpu.dot_dimension_numbers<[1], [0], [0], [1], [0, 0, 1, 1], [], []>} : vector<1x64xf32>, vector<64x256xf32>, vector<1x256xf32> -> vector<1x256xf32>
    %327 = arith.addf %322, %326 : vector<1x256xf32>
    %cst_131 = arith.constant 0.000000e+00 : f32
    %328 = vector.broadcast %cst_131 : f32 to vector<1x256xf32>
    %329 = arith.maximumf %327, %328 : vector<1x256xf32>
    %c0_132 = arith.constant 0 : index
    %c0_133 = arith.constant 0 : index
    %330 = vector.load %arg21[%c0_132, %c0_133] : memref<256x8xf32, #tpu.memory_space<vmem>>, vector<256x8xf32>
    %cst_134 = arith.constant dense<0.000000e+00> : vector<1x8xf32>
    %331 = tpu.matmul %329, %330, %cst_134 {dimension_numbers = #tpu.dot_dimension_numbers<[1], [0], [0], [1], [0, 0, 1, 1], [], []>} : vector<1x256xf32>, vector<256x8xf32>, vector<1x8xf32> -> vector<1x8xf32>
    %c0_135 = arith.constant 0 : index
    %c0_136 = arith.constant 0 : index
    %332 = vector.load %arg22[%c0_135, %c0_136] : memref<1x8xf32, #tpu.memory_space<vmem>>, vector<1x8xf32>
    %333 = arith.addf %331, %332 : vector<1x8xf32>
    %c1_137 = arith.constant 1 : index
    %c0_138 = arith.constant 0 : index
    %334 = vector.load %arg23[%c1_137, %c0_138] : memref<2x8xf32, #tpu.memory_space<vmem>>, vector<1x8xf32>
    tpu.vector_store %arg23[%c1_137, %c0_138], %333 {strides = array<i32>} : memref<2x8xf32, #tpu.memory_space<vmem>>, vector<1x8xf32>,
    return
  }
}

</mosaic_0001>

<llo_original>
// kernel: forward_pallas.1
$region0: #{forward_pallas.1}
  #allocation0 [shape = 'u32[]', space=smem, size = 0x4, offset = 0x4, fixed_abs, tag = 'smem constant byte address 0x4 - core index']
  #allocation1 [shape = 'u32[144,128]{1,0:T(1,128)}', space=vmem, size = 0x12000, scoped, tag = 'internal scratch']
  #allocation2 [shape = 'f32[1,1]{1,0:T(1,128)S(1)}', space=vmem, size = 0x200, scoped, tag = 'scoped memory for forward_pallas.1']
  #allocation3 [shape = 'f32[1,1]{1,0:T(1,128)S(1)}', space=vmem, size = 0x200, scoped, tag = 'scoped memory for forward_pallas.1']
  %s0 = inlined_call_operand.vmem [shape: f32[2,16,1], index: 0, kind: input, shape index: {}]
  %s1 = inlined_call_operand.<no memory space> [shape: f32[1,1], index: 1, kind: input, shape index: {}]
  %s2 = inlined_call_operand.<no memory space> [shape: f32[1,1], index: 2, kind: input, shape index: {}]
  %s3 = inlined_call_operand.vmem [shape: f32[3,4], index: 3, kind: input, shape index: {}]
  %s4 = inlined_call_operand.vmem [shape: f32[1,4], index: 4, kind: input, shape index: {}]
  %s5 = inlined_call_operand.vmem [shape: f32[1,4], index: 5, kind: input, shape index: {}]
  %s6 = inlined_call_operand.vmem [shape: f32[1,4], index: 6, kind: input, shape index: {}]
  %s7 = inlined_call_operand.vmem [shape: f32[12,8], index: 7, kind: input, shape index: {}]
  %s8 = inlined_call_operand.vmem [shape: f32[1,8], index: 8, kind: input, shape index: {}]
  %s9 = inlined_call_operand.vmem [shape: f32[24,16], index: 9, kind: input, shape index: {}]
  %s10 = inlined_call_operand.vmem [shape: f32[1,16], index: 10, kind: input, shape index: {}]
  %s11 = inlined_call_operand.vmem [shape: f32[1,16], index: 11, kind: input, shape index: {}]
  %s12 = inlined_call_operand.vmem [shape: f32[1,16], index: 12, kind: input, shape index: {}]
  %s13 = inlined_call_operand.vmem [shape: f32[48,32], index: 13, kind: input, shape index: {}]
  %s14 = inlined_call_operand.vmem [shape: f32[1,32], index: 14, kind: input, shape index: {}]
  %s15 = inlined_call_operand.vmem [shape: f32[96,64], index: 15, kind: input, shape index: {}]
  %s16 = inlined_call_operand.vmem [shape: f32[1,64], index: 16, kind: input, shape index: {}]
  %s17 = inlined_call_operand.vmem [shape: f32[1,64], index: 17, kind: input, shape index: {}]
  %s18 = inlined_call_operand.vmem [shape: f32[1,64], index: 18, kind: input, shape index: {}]
  %s19 = inlined_call_operand.vmem [shape: f32[2,64,256], index: 19, kind: input, shape index: {}]
  %s20 = inlined_call_operand.vmem [shape: f32[1,256], index: 20, kind: input, shape index: {}]
  %s21 = inlined_call_operand.vmem [shape: f32[256,8], index: 21, kind: input, shape index: {}]
  %s22 = inlined_call_operand.vmem [shape: f32[1,8], index: 22, kind: input, shape index: {}]
  %s23 = inlined_call_operand.hbm [shape: f32[2,8], index: 23, kind: output, shape index: {}]
  %s24 = sld [smem:[#allocation0]]
  $region102: #{forward_pallas.1} parent=0
    _
  %s26 = ssub.s32 1, %s24
  %s27 = scalar_select 0, %s26, %s24
  %v28 = vstv %s1
  %29 = vst [vmem:[#allocation2] sm:$0x1] %v28
  %v30 = vstv %s2
  %31 = vst [vmem:[#allocation3] sm:$0x1] %v30
  $region1: #{forward_pallas.1} parent=0
    #allocation4 [shape = 'u8[1024]{0}', space=vmem, size = 0x400, scoped, tag = 'output window, operand 0, single buffered']
    #allocation5 [shape = 's32[1]{0}', space=sflag, size = 0x4, scoped, tag = 'scoped memory for forward_pallas.1']
    %32 = vsyncpa [#allocation5], 0
    // Predicated region
    $region2: #{forward_pallas.1} parent=1 // pred_check
      _
    $region3: #{forward_pallas.1} parent=1 // pred_check_branch
      %34 = sbr.rel (0) target = $region5
    $region4: #{forward_pallas.1} parent=1 // pred_region
      _
    $region5: #{forward_pallas.1} parent=1 // pred_fallthru
      _
    // Predicated region
    $region6: #{forward_pallas.1} parent=1 // pred_check
      _
    $region7: #{forward_pallas.1} parent=1 // pred_check_branch
      %36 = sbr.rel (0) target = $region9
    $region8: #{forward_pallas.1} parent=1 // pred_region
      _
    $region9: #{forward_pallas.1} parent=1 // pred_fallthru
      _
    // Predicated region
    $region10: #{forward_pallas.1} parent=1 // pred_check
      _
    $region11: #{forward_pallas.1} parent=1 // pred_check_branch
      %38 = sbr.rel (0) target = $region13
    $region12: #{forward_pallas.1} parent=1 // pred_region
      _
    $region13: #{forward_pallas.1} parent=1 // pred_fallthru
      _
    // Predicated region
    $region14: #{forward_pallas.1} parent=1 // pred_check
      _
    $region15: #{forward_pallas.1} parent=1 // pred_check_branch
      %40 = sbr.rel (0) target = $region17
    $region16: #{forward_pallas.1} parent=1 // pred_region
      _
    $region17: #{forward_pallas.1} parent=1 // pred_fallthru
      _
    // Predicated region
    $region18: #{forward_pallas.1} parent=1 // pred_check
      _
    $region19: #{forward_pallas.1} parent=1 // pred_check_branch
      %42 = sbr.rel (0) target = $region21
    $region20: #{forward_pallas.1} parent=1 // pred_region
      _
    $region21: #{forward_pallas.1} parent=1 // pred_fallthru
      _
    // Predicated region
    $region22: #{forward_pallas.1} parent=1 // pred_check
      _
    $region23: #{forward_pallas.1} parent=1 // pred_check_branch
      %44 = sbr.rel (0) target = $region25
    $region24: #{forward_pallas.1} parent=1 // pred_region
      _
    $region25: #{forward_pallas.1} parent=1 // pred_fallthru
      _
    // Predicated region
    $region26: #{forward_pallas.1} parent=1 // pred_check
      _
    $region27: #{forward_pallas.1} parent=1 // pred_check_branch
      %46 = sbr.rel (0) target = $region29
    $region28: #{forward_pallas.1} parent=1 // pred_region
      _
    $region29: #{forward_pallas.1} parent=1 // pred_fallthru
      _
    // Predicated region
    $region30: #{forward_pallas.1} parent=1 // pred_check
      _
    $region31: #{forward_pallas.1} parent=1 // pred_check_branch
      %48 = sbr.rel (0) target = $region33
    $region32: #{forward_pallas.1} parent=1 // pred_region
      _
    $region33: #{forward_pallas.1} parent=1 // pred_fallthru
      _
    // Predicated region
    $region34: #{forward_pallas.1} parent=1 // pred_check
      _
    $region35: #{forward_pallas.1} parent=1 // pred_check_branch
      %50 = sbr.rel (0) target = $region37
    $region36: #{forward_pallas.1} parent=1 // pred_region
      _
    $region37: #{forward_pallas.1} parent=1 // pred_fallthru
      _
    // Predicated region
    $region38: #{forward_pallas.1} parent=1 // pred_check
      _
    $region39: #{forward_pallas.1} parent=1 // pred_check_branch
      %52 = sbr.rel (0) target = $region41
    $region40: #{forward_pallas.1} parent=1 // pred_region
      _
    $region41: #{forward_pallas.1} parent=1 // pred_fallthru
      _
    // Predicated region
    $region42: #{forward_pallas.1} parent=1 // pred_check
      _
    $region43: #{forward_pallas.1} parent=1 // pred_check_branch
      %54 = sbr.rel (0) target = $region45
    $region44: #{forward_pallas.1} parent=1 // pred_region
      _
    $region45: #{forward_pallas.1} parent=1 // pred_fallthru
      _
    // Predicated region
    $region46: #{forward_pallas.1} parent=1 // pred_check
      _
    $region47: #{forward_pallas.1} parent=1 // pred_check_branch
      %56 = sbr.rel (0) target = $region49
    $region48: #{forward_pallas.1} parent=1 // pred_region
      _
    $region49: #{forward_pallas.1} parent=1 // pred_fallthru
      _
    // Predicated region
    $region50: #{forward_pallas.1} parent=1 // pred_check
      _
    $region51: #{forward_pallas.1} parent=1 // pred_check_branch
      %58 = sbr.rel (0) target = $region53
    $region52: #{forward_pallas.1} parent=1 // pred_region
      _
    $region53: #{forward_pallas.1} parent=1 // pred_fallthru
      _
    // Predicated region
    $region54: #{forward_pallas.1} parent=1 // pred_check
      _
    $region55: #{forward_pallas.1} parent=1 // pred_check_branch
      %60 = sbr.rel (0) target = $region57
    $region56: #{forward_pallas.1} parent=1 // pred_region
      _
    $region57: #{forward_pallas.1} parent=1 // pred_fallthru
      _
    // Predicated region
    $region58: #{forward_pallas.1} parent=1 // pred_check
      _
    $region59: #{forward_pallas.1} parent=1 // pred_check_branch
      %62 = sbr.rel (0) target = $region61
    $region60: #{forward_pallas.1} parent=1 // pred_region
      _
    $region61: #{forward_pallas.1} parent=1 // pred_fallthru
      _
    // Predicated region
    $region62: #{forward_pallas.1} parent=1 // pred_check
      _
    $region63: #{forward_pallas.1} parent=1 // pred_check_branch
      %64 = sbr.rel (0) target = $region65
    $region64: #{forward_pallas.1} parent=1 // pred_region
      _
    $region65: #{forward_pallas.1} parent=1 // pred_fallthru
      _
    // Predicated region
    $region66: #{forward_pallas.1} parent=1 // pred_check
      _
    $region67: #{forward_pallas.1} parent=1 // pred_check_branch
      %66 = sbr.rel (0) target = $region69
    $region68: #{forward_pallas.1} parent=1 // pred_region
      _
    $region69: #{forward_pallas.1} parent=1 // pred_fallthru
      _
    // Predicated region
    $region70: #{forward_pallas.1} parent=1 // pred_check
      _
    $region71: #{forward_pallas.1} parent=1 // pred_check_branch
      %68 = sbr.rel (0) target = $region73
    $region72: #{forward_pallas.1} parent=1 // pred_region
      _
    $region73: #{forward_pallas.1} parent=1 // pred_fallthru
      _
    // Predicated region
    $region74: #{forward_pallas.1} parent=1 // pred_check
      _
    $region75: #{forward_pallas.1} parent=1 // pred_check_branch
      %70 = sbr.rel (0) target = $region77
    $region76: #{forward_pallas.1} parent=1 // pred_region
      _
    $region77: #{forward_pallas.1} parent=1 // pred_fallthru
      _
    // Predicated region
    $region78: #{forward_pallas.1} parent=1 // pred_check
      _
    $region79: #{forward_pallas.1} parent=1 // pred_check_branch
      %72 = sbr.rel (0) target = $region81
    $region80: #{forward_pallas.1} parent=1 // pred_region
      _
    $region81: #{forward_pallas.1} parent=1 // pred_fallthru
      _
    // Predicated region
    $region82: #{forward_pallas.1} parent=1 // pred_check
      _
    $region83: #{forward_pallas.1} parent=1 // pred_check_branch
      %74 = sbr.rel (0) target = $region85
    $region84: #{forward_pallas.1} parent=1 // pred_region
      _
    $region85: #{forward_pallas.1} parent=1 // pred_fallthru
      _
    // Predicated region
    $region86: #{forward_pallas.1} parent=1 // pred_check
      _
    $region87: #{forward_pallas.1} parent=1 // pred_check_branch
      %76 = sbr.rel (0) target = $region89
    $region88: #{forward_pallas.1} parent=1 // pred_region
      _
    $region89: #{forward_pallas.1} parent=1 // pred_fallthru
      _
    // Predicated region
    $region90: #{forward_pallas.1} parent=1 // pred_check
      _
    $region91: #{forward_pallas.1} parent=1 // pred_check_branch
      %78 = sbr.rel (0) target = $region93
    $region92: #{forward_pallas.1} parent=1 // pred_region
      _
    $region93: #{forward_pallas.1} parent=1 // pred_fallthru
      _
    %v79 = vld [vmem:[%s3] sm:$0x7]
    %v80 = vld [vmem:[%s0] sm:$0xff]
    %v81 = vld [vmem:[%s0 + $0x8] sm:$0xff]
    %v82 = vld [vmem:[#allocation2] sm:$0x1]
    %v84 = vlaneseq
    %v85 = vshrl.u32 %v84, 7
    %v86 = vsub.s32 0, %v85
    %v87 = vrot.slane %v82, %v86
    %v89 = vmul.f32 %v80, %v87
    %v90 = vmul.f32 %v81, %v87
    %v91 = vld [vmem:[#allocation3] sm:$0x1]
    %v93 = vlaneseq
    %v94 = vshrl.u32 %v93, 7
    %v95 = vsub.s32 0, %v94
    %v96 = vrot.slane %v91, %v95
    %v98 = vadd.f32 %v89, %v96
    %v99 = vadd.f32 %v90, %v96
    %vm102 = vcmask 1040384
    %v103 = vrot.slane %v98, 7
    %v104 = vrot.slane %v99, 7
    %v105 = vsel %vm102, %v103, %v104
    %v108 = vsel %vm102, 0.0, %v103
    %v109 = vsel %vm102, %v104, 0.0
    %v110 = vld [vmem:[%s4] sm:$0x1]
    %v112 = vlaneseq
    %v113 = vshrl.u32 %v112, 7
    %v114 = vsub.s32 0, %v113
    %v115 = vrot.slane %v110, %v114
    %v117 = vadd.f32 %v115, 0.0
    %119 = vset.pattern.permute.xlu0 0
    %120 = vperm.xlu0 %119, %v108
    %v121 = vpop.permute.xlu0 %120
    %123 = vset.pattern.permute.xlu0 0
    %124 = vperm.xlu0 %123, %v105
    %v125 = vpop.permute.xlu0 %124
    %v127 = vlaneseq
    %v128 = vshrl.u32 %v127, 7
    %v129 = vsub.s32 0, %v128
    %v130 = vrot.slane %v79, %v129
    %v131 = vmul.f32 %v121, %v130
    %v132 = vmul.f32 %v125, %v130
    %v133 = vadd.f32 %v117, %v131
    %v134 = vadd.f32 %v117, %v132
    %136 = vset.pattern.permute.xlu0 0
    %137 = vperm.xlu0 %136, %v109
    %v138 = vpop.permute.xlu0 %137
    %v140 = vlaneseq
    %v141 = vshrl.u32 %v140, 7
    %v142 = vsub.s32 1, %v141
    %v143 = vrot.slane %v79, %v142
    %v144 = vmul.f32 %v121, %v143
    %v145 = vmul.f32 %v125, %v143
    %v146 = vmul.f32 %v138, %v143
    %vm150 = vcmask 1046528
    %v151 = vrot.slane %v144, 1
    %v152 = vrot.slane %v145, 1
    %v153 = vsel %vm150, %v151, %v152
    %v154 = vrot.slane %v146, 1
    %v155 = vsel %vm150, %v152, %v154
    %v158 = vadd.f32 %v133, %v153
    %v159 = vadd.f32 %v134, %v155
    %v160 = vlaneseq
    %v161 = vshrl.u32 %v160, 7
    %v162 = vsub.s32 2, %v161
    %v163 = vrot.slane %v79, %v162
    %v164 = vmul.f32 %v121, %v163
    %v165 = vmul.f32 %v125, %v163
    %v166 = vmul.f32 %v138, %v163
    %vm170 = vcmask 1045504
    %v171 = vrot.slane %v164, 2
    %v172 = vrot.slane %v165, 2
    %v173 = vsel %vm170, %v171, %v172
    %v174 = vrot.slane %v166, 2
    %v175 = vsel %vm170, %v172, %v174
    %v178 = vadd.f32 %v158, %v173
    %v179 = vadd.f32 %v159, %v175
    %v180 = vmax.f32 %v178, 0.0
    %v181 = vmax.f32 %v179, 0.0
    %v183 = vrot.slane %v180, 1
    %v185 = vmax.f32 %v180, %v183
    %v187 = vrot.slane %v181, 1
    %v189 = vmax.f32 %v181, %v187
    %v191 = vrot.slane %v185, 1
    %v193 = vrot.slane %v185, 2
    %v195 = vrot.slane %v185, 3
    %v198 = vrot.slane %v189, 4
    %v200 = vrot.slane %v189, 5
    %v202 = vrot.slane %v189, 6
    %v204 = vrot.slane %v189, 7
    %v206 = vsel %vm102, %v185, %v191
    %vm207 = vcmask 1041408
    %v208 = vsel %vm207, %v206, %v193
    %vm209 = vcmask 1042432
    %v210 = vsel %vm209, %v208, %v195
    %vm211 = vcmask 1043456
    %v212 = vsel %vm211, %v210, %v198
    %vm213 = vcmask 1044480
    %v214 = vsel %vm213, %v212, %v200
    %v215 = vsel %vm170, %v214, %v202
    %v216 = vsel %vm150, %v215, %v204
    %v217 = vld [vmem:[%s5] sm:$0x1]
    %v219 = vlaneseq
    %v220 = vshrl.u32 %v219, 7
    %v221 = vsub.s32 0, %v220
    %v222 = vrot.slane %v217, %v221
    %v224 = vmul.f32 %v216, %v222
    %v225 = vld [vmem:[%s6] sm:$0x1]
    %v227 = vlaneseq
    %v228 = vshrl.u32 %v227, 7
    %v229 = vsub.s32 0, %v228
    %v230 = vrot.slane %v225, %v229
    %v232 = vadd.f32 %v224, %v230
    %v234 = vrot.slane %v232, 7
    %v236 = vsel %vm102, 0.0, %v234
    %v237 = vsel %vm102, %v234, 0.0
    %v240 = vrot.slane %v236, 1
    %v241 = vrot.slane %v237, 1
    %v242 = vsel %vm150, %v240, %v241
    %243 = vrot.lane.b32.xlu0 %v242, 4
    %v244 = vpop.permute.xlu0 %243
    %v246 = vrot.slane %v236, 2
    %v247 = vrot.slane %v237, 2
    %v248 = vsel %vm170, %v246, %v247
    %249 = vrot.lane.b32.xlu0 %v248, 8
    %v250 = vpop.permute.xlu0 %249
    %vm252 = vcmask 31744
    %v253 = vsel %vm252, %v236, %v244
    %vm254 = vcmask 64512
    %v255 = vsel %vm254, %v253, %v250
    %v256 = vld [vmem:[%s7] sm:$0xff]
    %v257 = vld [vmem:[%s7 + $0x8] sm:$0xf]
    %v258 = vld [vmem:[%s8] sm:$0x1]
    %v260 = vlaneseq
    %v261 = vshrl.u32 %v260, 7
    %v262 = vsub.s32 0, %v261
    %v263 = vrot.slane %v258, %v262
    %vm265 = vcmask 97280
    %v267 = vsel %vm265, %v255, 0
    %v270 = vsel %vm211, %v257, 0
    %272 = vmatprep.subr.mxu0 0.0
    %273 = vmatpush1.msra.mxu0 %v256
    %274 = vmatprep.subr.mxu0 0.0
    %275 = vmatpush1.msra.mxu0 %v270
    %276 = vmatprep.subr.mxu0 0.0
    %277 = vmatpush1.msra.mxu0 0.0
    %278 = vmatprep.subr.mxu0 0.0
    %279 = vmatpush1.msra.mxu0 0.0
    %280 = vmatprep.subr.mxu0 0.0
    %281 = vmatpush1.msra.mxu0 0.0
    %282 = vmatprep.subr.mxu0 0.0
    %283 = vmatpush1.msra.mxu0 0.0
    %284 = vmatprep.subr.mxu0 0.0
    %285 = vmatpush1.msra.mxu0 0.0
    %286 = vmatprep.subr.mxu0 0.0
    %287 = vmatpush1.msra.mxu0 0.0
    %288 = vmatprep.subr.mxu0 0.0
    %289 = vmatpush1.msra.mxu0 0.0
    %290 = vmatprep.subr.mxu0 0.0
    %291 = vmatpush1.msra.mxu0 0.0
    %292 = vmatprep.subr.mxu0 0.0
    %293 = vmatpush1.msra.mxu0 0.0
    %294 = vmatprep.subr.mxu0 0.0
    %295 = vmatpush1.msra.mxu0 0.0
    %296 = vmatprep.subr.mxu0 0.0
    %297 = vmatpush1.msra.mxu0 0.0
    %298 = vmatprep.subr.mxu0 0.0
    %299 = vmatpush1.msra.mxu0 0.0
    %300 = vmatprep.subr.mxu0 0.0
    %301 = vmatpush1.msra.mxu0 0.0
    %302 = vmatprep.subr.mxu0 0.0
    %303 = vmatpush1.msra.mxu0 0.0
    %304 = vmatprep.subr.mxu0 0.0
    %305 = vmatpush1.msra.mxu0 0.0
    %306 = vmatprep.subr.mxu0 0.0
    %307 = vmatpush1.msra.mxu0 0.0
    %308 = vmatprep.subr.mxu0 0.0
    %309 = vmatpush1.msra.mxu0 0.0
    %310 = vmatprep.subr.mxu0 0.0
    %311 = vmatpush1.msra.mxu0 0.0
    %312 = vmatprep.subr.mxu0 0.0
    %313 = vmatpush1.msra.mxu0 0.0
    %314 = vmatprep.subr.mxu0 0.0
    %315 = vmatpush1.msra.mxu0 0.0
    %316 = vmatprep.subr.mxu0 0.0
    %317 = vmatpush1.msra.mxu0 0.0
    %318 = vmatprep.subr.mxu0 0.0
    %319 = vmatpush1.msra.mxu0 0.0
    %320 = vmatprep.subr.mxu0 0.0
    %321 = vmatpush1.msra.mxu0 0.0
    %322 = vmatprep.subr.mxu0 0.0
    %323 = vmatpush1.msra.mxu0 0.0
    %324 = vmatprep.subr.mxu0 0.0
    %325 = vmatpush1.msra.mxu0 0.0
    %326 = vmatprep.subr.mxu0 0.0
    %327 = vmatpush1.msra.mxu0 0.0
    %328 = vmatprep.subr.mxu0 0.0
    %329 = vmatpush1.msra.mxu0 0.0
    %330 = vmatprep.subr.mxu0 0.0
    %331 = vmatpush1.msra.mxu0 0.0
    %332 = vmatprep.subr.mxu0 0.0
    %333 = vmatpush1.msra.mxu0 0.0
    %334 = vmatprep.subr.mxu0 0.0
    %335 = vmatpush1.msra.mxu0 0.0
    %336 = vmatprep.mubr.f32.mxu0 0.0
    %337 = vmatmul.mubr.f32.gmra.mrb[0].mxu0 %v267
    %v338 = vpop.f32.mrb[0].mxu0
    %v339 = vadd.f32 %v263, %v338
    %v340 = vpop.f32.mrb[0].mxu0
    %341 = vdwg.mxu0
    %v342 = vmax.f32 %v339, 0.0
    %v344 = vrot.slane %v342, 7
    %v346 = vsel %vm102, 0.0, %v344
    %v347 = vsel %vm102, %v344, 0.0
    %v350 = vrot.slane %v346, 1
    %v351 = vrot.slane %v347, 1
    %v352 = vsel %vm150, %v350, %v351
    %353 = vrot.lane.b32.xlu0 %v352, 8
    %v354 = vpop.permute.xlu0 %353
    %v356 = vrot.slane %v346, 2
    %v357 = vrot.slane %v347, 2
    %v358 = vsel %vm170, %v356, %v357
    %359 = vrot.lane.b32.xlu0 %v358, 16
    %v360 = vpop.permute.xlu0 %359
    %v362 = vsel %vm254, %v346, %v354
    %vm363 = vcmask 130048
    %v364 = vsel %vm363, %v362, %v360
    %v365 = vld [vmem:[%s9] sm:$0xff]
    %v366 = vld [vmem:[%s9 + $0x8] sm:$0xff]
    %v367 = vld [vmem:[%s9 + $0x10] sm:$0xff]
    %v368 = vld [vmem:[%s10] sm:$0x1]
    %v370 = vlaneseq
    %v371 = vshrl.u32 %v370, 7
    %v372 = vsub.s32 0, %v371
    %v373 = vrot.slane %v368, %v372
    %vm375 = vcmask 195584
    %v377 = vsel %vm375, %v364, 0
    %379 = vmatprep.subr.mxu0 0.0
    %380 = vmatpush1.msra.mxu0 %v365
    %381 = vmatprep.subr.mxu0 0.0
    %382 = vmatpush1.msra.mxu0 %v366
    %383 = vmatprep.subr.mxu0 0.0
    %384 = vmatpush1.msra.mxu0 %v367
    %385 = vmatprep.subr.mxu0 0.0
    %386 = vmatpush1.msra.mxu0 0.0
    %387 = vmatprep.subr.mxu0 0.0
    %388 = vmatpush1.msra.mxu0 0.0
    %389 = vmatprep.subr.mxu0 0.0
    %390 = vmatpush1.msra.mxu0 0.0
    %391 = vmatprep.subr.mxu0 0.0
    %392 = vmatpush1.msra.mxu0 0.0
    %393 = vmatprep.subr.mxu0 0.0
    %394 = vmatpush1.msra.mxu0 0.0
    %395 = vmatprep.subr.mxu0 0.0
    %396 = vmatpush1.msra.mxu0 0.0
    %397 = vmatprep.subr.mxu0 0.0
    %398 = vmatpush1.msra.mxu0 0.0
    %399 = vmatprep.subr.mxu0 0.0
    %400 = vmatpush1.msra.mxu0 0.0
    %401 = vmatprep.subr.mxu0 0.0
    %402 = vmatpush1.msra.mxu0 0.0
    %403 = vmatprep.subr.mxu0 0.0
    %404 = vmatpush1.msra.mxu0 0.0
    %405 = vmatprep.subr.mxu0 0.0
    %406 = vmatpush1.msra.mxu0 0.0
    %407 = vmatprep.subr.mxu0 0.0
    %408 = vmatpush1.msra.mxu0 0.0
    %409 = vmatprep.subr.mxu0 0.0
    %410 = vmatpush1.msra.mxu0 0.0
    %411 = vmatprep.subr.mxu0 0.0
    %412 = vmatpush1.msra.mxu0 0.0
    %413 = vmatprep.subr.mxu0 0.0
    %414 = vmatpush1.msra.mxu0 0.0
    %415 = vmatprep.subr.mxu0 0.0
    %416 = vmatpush1.msra.mxu0 0.0
    %417 = vmatprep.subr.mxu0 0.0
    %418 = vmatpush1.msra.mxu0 0.0
    %419 = vmatprep.subr.mxu0 0.0
    %420 = vmatpush1.msra.mxu0 0.0
    %421 = vmatprep.subr.mxu0 0.0
    %422 = vmatpush1.msra.mxu0 0.0
    %423 = vmatprep.subr.mxu0 0.0
    %424 = vmatpush1.msra.mxu0 0.0
    %425 = vmatprep.subr.mxu0 0.0
    %426 = vmatpush1.msra.mxu0 0.0
    %427 = vmatprep.subr.mxu0 0.0
    %428 = vmatpush1.msra.mxu0 0.0
    %429 = vmatprep.subr.mxu0 0.0
    %430 = vmatpush1.msra.mxu0 0.0
    %431 = vmatprep.subr.mxu0 0.0
    %432 = vmatpush1.msra.mxu0 0.0
    %433 = vmatprep.subr.mxu0 0.0
    %434 = vmatpush1.msra.mxu0 0.0
    %435 = vmatprep.subr.mxu0 0.0
    %436 = vmatpush1.msra.mxu0 0.0
    %437 = vmatprep.subr.mxu0 0.0
    %438 = vmatpush1.msra.mxu0 0.0
    %439 = vmatprep.subr.mxu0 0.0
    %440 = vmatpush1.msra.mxu0 0.0
    %441 = vmatprep.subr.mxu0 0.0
    %442 = vmatpush1.msra.mxu0 0.0
    %443 = vmatprep.mubr.f32.mxu0 0.0
    %444 = vmatmul.mubr.f32.gmra.mrb[0].mxu0 %v377
    %v445 = vpop.f32.mrb[0].mxu0
    %v446 = vadd.f32 %v373, %v445
    %v447 = vpop.f32.mrb[0].mxu0
    %448 = vdwg.mxu0
    %v449 = vmax.f32 %v446, 0.0
    %v451 = vrot.slane %v449, 1
    %v453 = vmax.f32 %v449, %v451
    %v455 = vrot.slane %v453, 1
    %v457 = vrot.slane %v453, 2
    %v459 = vrot.slane %v453, 3
    %v461 = vsel %vm102, %v453, %v455
    %v462 = vsel %vm207, %v461, %v457
    %v463 = vsel %vm209, %v462, %v459
    %v464 = vld [vmem:[%s11] sm:$0x1]
    %v466 = vlaneseq
    %v467 = vshrl.u32 %v466, 7
    %v468 = vsub.s32 0, %v467
    %v469 = vrot.slane %v464, %v468
    %v471 = vmul.f32 %v463, %v469
    %v472 = vld [vmem:[%s12] sm:$0x1]
    %v474 = vlaneseq
    %v475 = vshrl.u32 %v474, 7
    %v476 = vsub.s32 0, %v475
    %v477 = vrot.slane %v472, %v476
    %v479 = vadd.f32 %v471, %v477
    %v481 = vrot.slane %v479, 7
    %v483 = vsel %vm102, 0.0, %v481
    %v484 = vsel %vm213, %v483, 0.0
    %v486 = vrot.slane %v484, 1
    %487 = vrot.lane.b32.xlu0 %v486, 16
    %v488 = vpop.permute.xlu0 %487
    %v490 = vrot.slane %v484, 2
    %491 = vrot.lane.b32.xlu0 %v490, 32
    %v492 = vpop.permute.xlu0 %491
    %v494 = vsel %vm363, %v484, %v488
    %vm495 = vcmask 261120
    %v496 = vsel %vm495, %v494, %v492
    %v497 = vld [vmem:[%s13] sm:$0xff]
    %v498 = vld [vmem:[%s13 + $0x8] sm:$0xff]
    %v499 = vld [vmem:[%s13 + $0x10] sm:$0xff]
    %v500 = vld [vmem:[%s13 + $0x18] sm:$0xff]
    %v501 = vld [vmem:[%s13 + $0x20] sm:$0xff]
    %v502 = vld [vmem:[%s13 + $0x28] sm:$0xff]
    %v503 = vld [vmem:[%s14] sm:$0x1]
    %v505 = vlaneseq
    %v506 = vshrl.u32 %v505, 7
    %v507 = vsub.s32 0, %v506
    %v508 = vrot.slane %v503, %v507
    %vm510 = vcmask 392192
    %v512 = vsel %vm510, %v496, 0
    %514 = vmatprep.subr.mxu0 0.0
    %515 = vmatpush1.msra.mxu0 %v497
    %516 = vmatprep.subr.mxu0 0.0
    %517 = vmatpush1.msra.mxu0 %v498
    %518 = vmatprep.subr.mxu0 0.0
    %519 = vmatpush1.msra.mxu0 %v499
    %520 = vmatprep.subr.mxu0 0.0
    %521 = vmatpush1.msra.mxu0 %v500
    %522 = vmatprep.subr.mxu0 0.0
    %523 = vmatpush1.msra.mxu0 %v501
    %524 = vmatprep.subr.mxu0 0.0
    %525 = vmatpush1.msra.mxu0 %v502
    %526 = vmatprep.subr.mxu0 0.0
    %527 = vmatpush1.msra.mxu0 0.0
    %528 = vmatprep.subr.mxu0 0.0
    %529 = vmatpush1.msra.mxu0 0.0
    %530 = vmatprep.subr.mxu0 0.0
    %531 = vmatpush1.msra.mxu0 0.0
    %532 = vmatprep.subr.mxu0 0.0
    %533 = vmatpush1.msra.mxu0 0.0
    %534 = vmatprep.subr.mxu0 0.0
    %535 = vmatpush1.msra.mxu0 0.0
    %536 = vmatprep.subr.mxu0 0.0
    %537 = vmatpush1.msra.mxu0 0.0
    %538 = vmatprep.subr.mxu0 0.0
    %539 = vmatpush1.msra.mxu0 0.0
    %540 = vmatprep.subr.mxu0 0.0
    %541 = vmatpush1.msra.mxu0 0.0
    %542 = vmatprep.subr.mxu0 0.0
    %543 = vmatpush1.msra.mxu0 0.0
    %544 = vmatprep.subr.mxu0 0.0
    %545 = vmatpush1.msra.mxu0 0.0
    %546 = vmatprep.subr.mxu0 0.0
    %547 = vmatpush1.msra.mxu0 0.0
    %548 = vmatprep.subr.mxu0 0.0
    %549 = vmatpush1.msra.mxu0 0.0
    %550 = vmatprep.subr.mxu0 0.0
    %551 = vmatpush1.msra.mxu0 0.0
    %552 = vmatprep.subr.mxu0 0.0
    %553 = vmatpush1.msra.mxu0 0.0
    %554 = vmatprep.subr.mxu0 0.0
    %555 = vmatpush1.msra.mxu0 0.0
    %556 = vmatprep.subr.mxu0 0.0
    %557 = vmatpush1.msra.mxu0 0.0
    %558 = vmatprep.subr.mxu0 0.0
    %559 = vmatpush1.msra.mxu0 0.0
    %560 = vmatprep.subr.mxu0 0.0
    %561 = vmatpush1.msra.mxu0 0.0
    %562 = vmatprep.subr.mxu0 0.0
    %563 = vmatpush1.msra.mxu0 0.0
    %564 = vmatprep.subr.mxu0 0.0
    %565 = vmatpush1.msra.mxu0 0.0
    %566 = vmatprep.subr.mxu0 0.0
    %567 = vmatpush1.msra.mxu0 0.0
    %568 = vmatprep.subr.mxu0 0.0
    %569 = vmatpush1.msra.mxu0 0.0
    %570 = vmatprep.subr.mxu0 0.0
    %571 = vmatpush1.msra.mxu0 0.0
    %572 = vmatprep.subr.mxu0 0.0
    %573 = vmatpush1.msra.mxu0 0.0
    %574 = vmatprep.subr.mxu0 0.0
    %575 = vmatpush1.msra.mxu0 0.0
    %576 = vmatprep.subr.mxu0 0.0
    %577 = vmatpush1.msra.mxu0 0.0
    %578 = vmatprep.mubr.f32.mxu0 0.0
    %579 = vmatmul.mubr.f32.gmra.mrb[0].mxu0 %v512
    %v580 = vpop.f32.mrb[0].mxu0
    %v581 = vadd.f32 %v508, %v580
    %v582 = vpop.f32.mrb[0].mxu0
    %583 = vdwg.mxu0
    %v584 = vmax.f32 %v581, 0.0
    %v586 = vrot.slane %v584, 7
    %v588 = vsel %vm102, 0.0, %v586
    %v589 = vsel %vm213, %v588, 0.0
    %v591 = vrot.slane %v589, 1
    %592 = vrot.lane.b32.xlu0 %v591, 32
    %v593 = vpop.permute.xlu0 %592
    %v595 = vrot.slane %v589, 2
    %596 = vrot.lane.b32.xlu0 %v595, 64
    %v597 = vpop.permute.xlu0 %596
    %v599 = vsel %vm495, %v589, %v593
    %vm600 = vcmask 523264
    %v601 = vsel %vm600, %v599, %v597
    %v602 = vld [vmem:[%s15] sm:$0xff]
    %v603 = vld [vmem:[%s15 + $0x8] sm:$0xff]
    %v604 = vld [vmem:[%s15 + $0x10] sm:$0xff]
    %v605 = vld [vmem:[%s15 + $0x18] sm:$0xff]
    %v606 = vld [vmem:[%s15 + $0x20] sm:$0xff]
    %v607 = vld [vmem:[%s15 + $0x28] sm:$0xff]
    %v608 = vld [vmem:[%s15 + $0x30] sm:$0xff]
    %v609 = vld [vmem:[%s15 + $0x38] sm:$0xff]
    %v610 = vld [vmem:[%s15 + $0x40] sm:$0xff]
    %v611 = vld [vmem:[%s15 + $0x48] sm:$0xff]
    %v612 = vld [vmem:[%s15 + $0x50] sm:$0xff]
    %v613 = vld [vmem:[%s15 + $0x58] sm:$0xff]
    %v614 = vld [vmem:[%s16] sm:$0x1]
    %v616 = vlaneseq
    %v617 = vshrl.u32 %v616, 7
    %v618 = vsub.s32 0, %v617
    %v619 = vrot.slane %v614, %v618
    %vm621 = vcmask 785408
    %v623 = vsel %vm621, %v601, 0
    %625 = vmatprep.subr.mxu0 0.0
    %626 = vmatpush1.msra.mxu0 %v602
    %627 = vmatprep.subr.mxu0 0.0
    %628 = vmatpush1.msra.mxu0 %v603
    %629 = vmatprep.subr.mxu0 0.0
    %630 = vmatpush1.msra.mxu0 %v604
    %631 = vmatprep.subr.mxu0 0.0
    %632 = vmatpush1.msra.mxu0 %v605
    %633 = vmatprep.subr.mxu0 0.0
    %634 = vmatpush1.msra.mxu0 %v606
    %635 = vmatprep.subr.mxu0 0.0
    %636 = vmatpush1.msra.mxu0 %v607
    %637 = vmatprep.subr.mxu0 0.0
    %638 = vmatpush1.msra.mxu0 %v608
    %639 = vmatprep.subr.mxu0 0.0
    %640 = vmatpush1.msra.mxu0 %v609
    %641 = vmatprep.subr.mxu0 0.0
    %642 = vmatpush1.msra.mxu0 %v610
    %643 = vmatprep.subr.mxu0 0.0
    %644 = vmatpush1.msra.mxu0 %v611
    %645 = vmatprep.subr.mxu0 0.0
    %646 = vmatpush1.msra.mxu0 %v612
    %647 = vmatprep.subr.mxu0 0.0
    %648 = vmatpush1.msra.mxu0 %v613
    %649 = vmatprep.subr.mxu0 0.0
    %650 = vmatpush1.msra.mxu0 0.0
    %651 = vmatprep.subr.mxu0 0.0
    %652 = vmatpush1.msra.mxu0 0.0
    %653 = vmatprep.subr.mxu0 0.0
    %654 = vmatpush1.msra.mxu0 0.0
    %655 = vmatprep.subr.mxu0 0.0
    %656 = vmatpush1.msra.mxu0 0.0
    %657 = vmatprep.subr.mxu0 0.0
    %658 = vmatpush1.msra.mxu0 0.0
    %659 = vmatprep.subr.mxu0 0.0
    %660 = vmatpush1.msra.mxu0 0.0
    %661 = vmatprep.subr.mxu0 0.0
    %662 = vmatpush1.msra.mxu0 0.0
    %663 = vmatprep.subr.mxu0 0.0
    %664 = vmatpush1.msra.mxu0 0.0
    %665 = vmatprep.subr.mxu0 0.0
    %666 = vmatpush1.msra.mxu0 0.0
    %667 = vmatprep.subr.mxu0 0.0
    %668 = vmatpush1.msra.mxu0 0.0
    %669 = vmatprep.subr.mxu0 0.0
    %670 = vmatpush1.msra.mxu0 0.0
    %671 = vmatprep.subr.mxu0 0.0
    %672 = vmatpush1.msra.mxu0 0.0
    %673 = vmatprep.subr.mxu0 0.0
    %674 = vmatpush1.msra.mxu0 0.0
    %675 = vmatprep.subr.mxu0 0.0
    %676 = vmatpush1.msra.mxu0 0.0
    %677 = vmatprep.subr.mxu0 0.0
    %678 = vmatpush1.msra.mxu0 0.0
    %679 = vmatprep.subr.mxu0 0.0
    %680 = vmatpush1.msra.mxu0 0.0
    %681 = vmatprep.subr.mxu0 0.0
    %682 = vmatpush1.msra.mxu0 0.0
    %683 = vmatprep.subr.mxu0 0.0
    %684 = vmatpush1.msra.mxu0 0.0
    %685 = vmatprep.subr.mxu0 0.0
    %686 = vmatpush1.msra.mxu0 0.0
    %687 = vmatprep.subr.mxu0 0.0
    %688 = vmatpush1.msra.mxu0 0.0
    %689 = vmatprep.mubr.f32.mxu0 0.0
    %690 = vmatmul.mubr.f32.gmra.mrb[0].mxu0 %v623
    %v691 = vpop.f32.mrb[0].mxu0
    %v692 = vadd.f32 %v619, %v691
    %v693 = vpop.f32.mrb[0].mxu0
    %694 = vdwg.mxu0
    %v695 = vmax.f32 %v692, 0.0
    %v697 = vrot.slane %v695, 1
    %v699 = vmax.f32 %v695, %v697
    %v701 = vrot.slane %v699, 1
    %v703 = vsel %vm102, %v699, %v701
    %v704 = vld [vmem:[%s17] sm:$0x1]
    %v706 = vlaneseq
    %v707 = vshrl.u32 %v706, 7
    %v708 = vsub.s32 0, %v707
    %v709 = vrot.slane %v704, %v708
    %v711 = vmul.f32 %v703, %v709
    %v712 = vld [vmem:[%s18] sm:$0x1]
    %v714 = vlaneseq
    %v715 = vshrl.u32 %v714, 7
    %v716 = vsub.s32 0, %v715
    %v717 = vrot.slane %v712, %v716
    %v719 = vadd.f32 %v711, %v717
    %v720 = vld [vmem:[%s20] sm:$0x3]
    %v721 = vld [vmem:[%s19] sm:$0xff]
    %v722 = vld [vmem:[%s19 + $0x8] sm:$0xff]
    %v723 = vld [vmem:[%s19 + $0x10] sm:$0xff]
    %v724 = vld [vmem:[%s19 + $0x18] sm:$0xff]
    %v725 = vld [vmem:[%s19 + $0x20] sm:$0xff]
    %v726 = vld [vmem:[%s19 + $0x28] sm:$0xff]
    %v727 = vld [vmem:[%s19 + $0x30] sm:$0xff]
    %v728 = vld [vmem:[%s19 + $0x38] sm:$0xff]
    %v729 = vld [vmem:[%s19 + $0x40] sm:$0xff]
    %v730 = vld [vmem:[%s19 + $0x48] sm:$0xff]
    %v731 = vld [vmem:[%s19 + $0x50] sm:$0xff]
    %v732 = vld [vmem:[%s19 + $0x58] sm:$0xff]
    %v733 = vld [vmem:[%s19 + $0x60] sm:$0xff]
    %v734 = vld [vmem:[%s19 + $0x68] sm:$0xff]
    %v735 = vld [vmem:[%s19 + $0x70] sm:$0xff]
    %v736 = vld [vmem:[%s19 + $0x78] sm:$0xff]
    %v738 = vsel %vm600, %v719, 0
    %740 = vmatprep.subr.mxu0 %v722
    %741 = vmatpush1.msra.mxu0 %v721
    %742 = vmatprep.subr.mxu0 %v724
    %743 = vmatpush1.msra.mxu0 %v723
    %744 = vmatprep.subr.mxu0 %v726
    %745 = vmatpush1.msra.mxu0 %v725
    %746 = vmatprep.subr.mxu0 %v728
    %747 = vmatpush1.msra.mxu0 %v727
    %748 = vmatprep.subr.mxu0 %v730
    %749 = vmatpush1.msra.mxu0 %v729
    %750 = vmatprep.subr.mxu0 %v732
    %751 = vmatpush1.msra.mxu0 %v731
    %752 = vmatprep.subr.mxu0 %v734
    %753 = vmatpush1.msra.mxu0 %v733
    %754 = vmatprep.subr.mxu0 %v736
    %755 = vmatpush1.msra.mxu0 %v735
    %756 = vmatprep.subr.mxu0 0.0
    %757 = vmatpush1.msra.mxu0 0.0
    %758 = vmatprep.subr.mxu0 0.0
    %759 = vmatpush1.msra.mxu0 0.0
    %760 = vmatprep.subr.mxu0 0.0
    %761 = vmatpush1.msra.mxu0 0.0
    %762 = vmatprep.subr.mxu0 0.0
    %763 = vmatpush1.msra.mxu0 0.0
    %764 = vmatprep.subr.mxu0 0.0
    %765 = vmatpush1.msra.mxu0 0.0
    %766 = vmatprep.subr.mxu0 0.0
    %767 = vmatpush1.msra.mxu0 0.0
    %768 = vmatprep.subr.mxu0 0.0
    %769 = vmatpush1.msra.mxu0 0.0
    %770 = vmatprep.subr.mxu0 0.0
    %771 = vmatpush1.msra.mxu0 0.0
    %772 = vmatprep.subr.mxu0 0.0
    %773 = vmatpush1.msra.mxu0 0.0
    %774 = vmatprep.subr.mxu0 0.0
    %775 = vmatpush1.msra.mxu0 0.0
    %776 = vmatprep.subr.mxu0 0.0
    %777 = vmatpush1.msra.mxu0 0.0
    %778 = vmatprep.subr.mxu0 0.0
    %779 = vmatpush1.msra.mxu0 0.0
    %780 = vmatprep.subr.mxu0 0.0
    %781 = vmatpush1.msra.mxu0 0.0
    %782 = vmatprep.subr.mxu0 0.0
    %783 = vmatpush1.msra.mxu0 0.0
    %784 = vmatprep.subr.mxu0 0.0
    %785 = vmatpush1.msra.mxu0 0.0
    %786 = vmatprep.subr.mxu0 0.0
    %787 = vmatpush1.msra.mxu0 0.0
    %788 = vmatprep.subr.mxu0 0.0
    %789 = vmatpush1.msra.mxu0 0.0
    %790 = vmatprep.subr.mxu0 0.0
    %791 = vmatpush1.msra.mxu0 0.0
    %792 = vmatprep.subr.mxu0 0.0
    %793 = vmatpush1.msra.mxu0 0.0
    %794 = vmatprep.subr.mxu0 0.0
    %795 = vmatpush1.msra.mxu0 0.0
    %796 = vmatprep.subr.mxu0 0.0
    %797 = vmatpush1.msra.mxu0 0.0
    %798 = vmatprep.subr.mxu0 0.0
    %799 = vmatpush1.msra.mxu0 0.0
    %800 = vmatprep.subr.mxu0 0.0
    %801 = vmatpush1.msra.mxu0 0.0
    %802 = vmatprep.subr.mxu0 0.0
    %803 = vmatpush1.msra.mxu0 0.0
    %804 = vmatprep.mubr.f32.mxu0 0.0
    %805 = vmatmul.mubr.f32.gmra.mrb[0].mxu0 %v738
    %v806 = vpop.f32.mrb[0].mxu0
    %v807 = vadd.f32 0.0, %v806
    %v808 = vpop.f32.mrb[0].mxu0
    %v809 = vadd.f32 0.0, %v808
    %810 = vdwg.mxu0
    %v813 = vcombine.low %v807, %v809
    %v815 = vunpack.c.l.s4 1966171168
    %v816 = vunpack.c.0.s8 %v815
    %v817 = vlaneseq
    %v818 = vshrl.u32 %v817, 7
    %v819 = vsub.s32 %v816, %v818
    %v820 = vrot.slane %v813, %v819
    %v822 = vunpack.c.l.s4 1966171168
    %v823 = vunpack.c.0.s8 %v822
    %v824 = vlaneseq
    %v825 = vshrl.u32 %v824, 7
    %v826 = vsub.s32 %v823, %v825
    %v827 = vrot.slane %v820, %v826
    %v829 = vadd.f32 %v720, %v827
    %s830 = scalar_lea.vmem %s19, 128
    %v831 = vld [vmem:[%s830] sm:$0xff]
    %v832 = vld [vmem:[%s830 + $0x8] sm:$0xff]
    %v833 = vld [vmem:[%s830 + $0x10] sm:$0xff]
    %v834 = vld [vmem:[%s830 + $0x18] sm:$0xff]
    %v835 = vld [vmem:[%s830 + $0x20] sm:$0xff]
    %v836 = vld [vmem:[%s830 + $0x28] sm:$0xff]
    %v837 = vld [vmem:[%s830 + $0x30] sm:$0xff]
    %v838 = vld [vmem:[%s830 + $0x38] sm:$0xff]
    %v839 = vld [vmem:[%s830 + $0x40] sm:$0xff]
    %v840 = vld [vmem:[%s830 + $0x48] sm:$0xff]
    %v841 = vld [vmem:[%s830 + $0x50] sm:$0xff]
    %v842 = vld [vmem:[%s830 + $0x58] sm:$0xff]
    %v843 = vld [vmem:[%s830 + $0x60] sm:$0xff]
    %v844 = vld [vmem:[%s830 + $0x68] sm:$0xff]
    %v845 = vld [vmem:[%s830 + $0x70] sm:$0xff]
    %v846 = vld [vmem:[%s830 + $0x78] sm:$0xff]
    %v847 = vrot.slane %v719, 1
    %v848 = vsel %vm600, %v847, 0
    %850 = vmatprep.subr.mxu0 %v832
    %851 = vmatpush1.msra.mxu0 %v831
    %852 = vmatprep.subr.mxu0 %v834
    %853 = vmatpush1.msra.mxu0 %v833
    %854 = vmatprep.subr.mxu0 %v836
    %855 = vmatpush1.msra.mxu0 %v835
    %856 = vmatprep.subr.mxu0 %v838
    %857 = vmatpush1.msra.mxu0 %v837
    %858 = vmatprep.subr.mxu0 %v840
    %859 = vmatpush1.msra.mxu0 %v839
    %860 = vmatprep.subr.mxu0 %v842
    %861 = vmatpush1.msra.mxu0 %v841
    %862 = vmatprep.subr.mxu0 %v844
    %863 = vmatpush1.msra.mxu0 %v843
    %864 = vmatprep.subr.mxu0 %v846
    %865 = vmatpush1.msra.mxu0 %v845
    %866 = vmatprep.subr.mxu0 0.0
    %867 = vmatpush1.msra.mxu0 0.0
    %868 = vmatprep.subr.mxu0 0.0
    %869 = vmatpush1.msra.mxu0 0.0
    %870 = vmatprep.subr.mxu0 0.0
    %871 = vmatpush1.msra.mxu0 0.0
    %872 = vmatprep.subr.mxu0 0.0
    %873 = vmatpush1.msra.mxu0 0.0
    %874 = vmatprep.subr.mxu0 0.0
    %875 = vmatpush1.msra.mxu0 0.0
    %876 = vmatprep.subr.mxu0 0.0
    %877 = vmatpush1.msra.mxu0 0.0
    %878 = vmatprep.subr.mxu0 0.0
    %879 = vmatpush1.msra.mxu0 0.0
    %880 = vmatprep.subr.mxu0 0.0
    %881 = vmatpush1.msra.mxu0 0.0
    %882 = vmatprep.subr.mxu0 0.0
    %883 = vmatpush1.msra.mxu0 0.0
    %884 = vmatprep.subr.mxu0 0.0
    %885 = vmatpush1.msra.mxu0 0.0
    %886 = vmatprep.subr.mxu0 0.0
    %887 = vmatpush1.msra.mxu0 0.0
    %888 = vmatprep.subr.mxu0 0.0
    %889 = vmatpush1.msra.mxu0 0.0
    %890 = vmatprep.subr.mxu0 0.0
    %891 = vmatpush1.msra.mxu0 0.0
    %892 = vmatprep.subr.mxu0 0.0
    %893 = vmatpush1.msra.mxu0 0.0
    %894 = vmatprep.subr.mxu0 0.0
    %895 = vmatpush1.msra.mxu0 0.0
    %896 = vmatprep.subr.mxu0 0.0
    %897 = vmatpush1.msra.mxu0 0.0
    %898 = vmatprep.subr.mxu0 0.0
    %899 = vmatpush1.msra.mxu0 0.0
    %900 = vmatprep.subr.mxu0 0.0
    %901 = vmatpush1.msra.mxu0 0.0
    %902 = vmatprep.subr.mxu0 0.0
    %903 = vmatpush1.msra.mxu0 0.0
    %904 = vmatprep.subr.mxu0 0.0
    %905 = vmatpush1.msra.mxu0 0.0
    %906 = vmatprep.subr.mxu0 0.0
    %907 = vmatpush1.msra.mxu0 0.0
    %908 = vmatprep.subr.mxu0 0.0
    %909 = vmatpush1.msra.mxu0 0.0
    %910 = vmatprep.subr.mxu0 0.0
    %911 = vmatpush1.msra.mxu0 0.0
    %912 = vmatprep.subr.mxu0 0.0
    %913 = vmatpush1.msra.mxu0 0.0
    %914 = vmatprep.mubr.f32.mxu0 0.0
    %915 = vmatmul.mubr.f32.gmra.mrb[0].mxu0 %v848
    %v916 = vpop.f32.mrb[0].mxu0
    %v917 = vadd.f32 0.0, %v916
    %v918 = vpop.f32.mrb[0].mxu0
    %v919 = vadd.f32 0.0, %v918
    %920 = vdwg.mxu0
    %v923 = vcombine.low %v917, %v919
    %v925 = vunpack.c.l.s4 1966171168
    %v926 = vunpack.c.0.s8 %v925
    %v927 = vlaneseq
    %v928 = vshrl.u32 %v927, 7
    %v929 = vsub.s32 %v926, %v928
    %v930 = vrot.slane %v923, %v929
    %v932 = vunpack.c.l.s4 1966171168
    %v933 = vunpack.c.0.s8 %v932
    %v934 = vlaneseq
    %v935 = vshrl.u32 %v934, 7
    %v936 = vsub.s32 %v933, %v935
    %v937 = vrot.slane %v930, %v936
    %v939 = vadd.f32 %v829, %v937
    %v940 = vmax.f32 %v939, 0.0
    %v941 = vld [vmem:[%s21] sm:$0xff]
    %v942 = vld [vmem:[%s21 + $0x8] sm:$0xff]
    %v943 = vld [vmem:[%s21 + $0x10] sm:$0xff]
    %v944 = vld [vmem:[%s21 + $0x18] sm:$0xff]
    %v945 = vld [vmem:[%s21 + $0x20] sm:$0xff]
    %v946 = vld [vmem:[%s21 + $0x28] sm:$0xff]
    %v947 = vld [vmem:[%s21 + $0x30] sm:$0xff]
    %v948 = vld [vmem:[%s21 + $0x38] sm:$0xff]
    %v949 = vld [vmem:[%s21 + $0x40] sm:$0xff]
    %v950 = vld [vmem:[%s21 + $0x48] sm:$0xff]
    %v951 = vld [vmem:[%s21 + $0x50] sm:$0xff]
    %v952 = vld [vmem:[%s21 + $0x58] sm:$0xff]
    %v953 = vld [vmem:[%s21 + $0x60] sm:$0xff]
    %v954 = vld [vmem:[%s21 + $0x68] sm:$0xff]
    %v955 = vld [vmem:[%s21 + $0x70] sm:$0xff]
    %v956 = vld [vmem:[%s21 + $0x78] sm:$0xff]
    %v957 = vld [vmem:[%s21 + $0x80] sm:$0xff]
    %v958 = vld [vmem:[%s21 + $0x88] sm:$0xff]
    %v959 = vld [vmem:[%s21 + $0x90] sm:$0xff]
    %v960 = vld [vmem:[%s21 + $0x98] sm:$0xff]
    %v961 = vld [vmem:[%s21 + $0xa0] sm:$0xff]
    %v962 = vld [vmem:[%s21 + $0xa8] sm:$0xff]
    %v963 = vld [vmem:[%s21 + $0xb0] sm:$0xff]
    %v964 = vld [vmem:[%s21 + $0xb8] sm:$0xff]
    %v965 = vld [vmem:[%s21 + $0xc0] sm:$0xff]
    %v966 = vld [vmem:[%s21 + $0xc8] sm:$0xff]
    %v967 = vld [vmem:[%s21 + $0xd0] sm:$0xff]
    %v968 = vld [vmem:[%s21 + $0xd8] sm:$0xff]
    %v969 = vld [vmem:[%s21 + $0xe0] sm:$0xff]
    %v970 = vld [vmem:[%s21 + $0xe8] sm:$0xff]
    %v971 = vld [vmem:[%s21 + $0xf0] sm:$0xff]
    %v972 = vld [vmem:[%s21 + $0xf8] sm:$0xff]
    %v973 = vld [vmem:[%s22] sm:$0x1]
    %v975 = vlaneseq
    %v976 = vshrl.u32 %v975, 7
    %v977 = vsub.s32 0, %v976
    %v978 = vrot.slane %v940, %v977
    %v979 = vlaneseq
    %v980 = vshrl.u32 %v979, 7
    %v981 = vsub.s32 1, %v980
    %v982 = vrot.slane %v940, %v981
    %985 = vmatprep.subr.mxu0 0.0
    %986 = vmatpush1.msra.mxu0 %v941
    %987 = vmatprep.subr.mxu0 0.0
    %988 = vmatpush1.msra.mxu0 %v942
    %989 = vmatprep.subr.mxu0 0.0
    %990 = vmatpush1.msra.mxu0 %v943
    %991 = vmatprep.subr.mxu0 0.0
    %992 = vmatpush1.msra.mxu0 %v944
    %993 = vmatprep.subr.mxu0 0.0
    %994 = vmatpush1.msra.mxu0 %v945
    %995 = vmatprep.subr.mxu0 0.0
    %996 = vmatpush1.msra.mxu0 %v946
    %997 = vmatprep.subr.mxu0 0.0
    %998 = vmatpush1.msra.mxu0 %v947
    %999 = vmatprep.subr.mxu0 0.0
    %1000 = vmatpush1.msra.mxu0 %v948
    %1001 = vmatprep.subr.mxu0 0.0
    %1002 = vmatpush1.msra.mxu0 %v949
    %1003 = vmatprep.subr.mxu0 0.0
    %1004 = vmatpush1.msra.mxu0 %v950
    %1005 = vmatprep.subr.mxu0 0.0
    %1006 = vmatpush1.msra.mxu0 %v951
    %1007 = vmatprep.subr.mxu0 0.0
    %1008 = vmatpush1.msra.mxu0 %v952
    %1009 = vmatprep.subr.mxu0 0.0
    %1010 = vmatpush1.msra.mxu0 %v953
    %1011 = vmatprep.subr.mxu0 0.0
    %1012 = vmatpush1.msra.mxu0 %v954
    %1013 = vmatprep.subr.mxu0 0.0
    %1014 = vmatpush1.msra.mxu0 %v955
    %1015 = vmatprep.subr.mxu0 0.0
    %1016 = vmatpush1.msra.mxu0 %v956
    %1017 = vmatprep.subr.mxu0 0.0
    %1018 = vmatpush1.msra.mxu0 %v957
    %1019 = vmatprep.subr.mxu0 0.0
    %1020 = vmatpush1.msra.mxu0 %v958
    %1021 = vmatprep.subr.mxu0 0.0
    %1022 = vmatpush1.msra.mxu0 %v959
    %1023 = vmatprep.subr.mxu0 0.0
    %1024 = vmatpush1.msra.mxu0 %v960
    %1025 = vmatprep.subr.mxu0 0.0
    %1026 = vmatpush1.msra.mxu0 %v961
    %1027 = vmatprep.subr.mxu0 0.0
    %1028 = vmatpush1.msra.mxu0 %v962
    %1029 = vmatprep.subr.mxu0 0.0
    %1030 = vmatpush1.msra.mxu0 %v963
    %1031 = vmatprep.subr.mxu0 0.0
    %1032 = vmatpush1.msra.mxu0 %v964
    %1033 = vmatprep.subr.mxu0 0.0
    %1034 = vmatpush1.msra.mxu0 %v965
    %1035 = vmatprep.subr.mxu0 0.0
    %1036 = vmatpush1.msra.mxu0 %v966
    %1037 = vmatprep.subr.mxu0 0.0
    %1038 = vmatpush1.msra.mxu0 %v967
    %1039 = vmatprep.subr.mxu0 0.0
    %1040 = vmatpush1.msra.mxu0 %v968
    %1041 = vmatprep.subr.mxu0 0.0
    %1042 = vmatpush1.msra.mxu0 %v969
    %1043 = vmatprep.subr.mxu0 0.0
    %1044 = vmatpush1.msra.mxu0 %v970
    %1045 = vmatprep.subr.mxu0 0.0
    %1046 = vmatpush1.msra.mxu0 %v971
    %1047 = vmatprep.subr.mxu0 0.0
    %1048 = vmatpush1.msra.mxu0 %v972
    %1049 = vmatprep.mubr.f32.mxu0 %v982
    %1050 = vmatmul.mubr.f32.gmra.mrb[0].mxu0 %v978
    %v1051 = vpop.f32.mrb[0].mxu0
    %v1052 = vadd.f32 %v973, %v1051
    %v1053 = vpop.f32.mrb[0].mxu0
    %1054 = vdwg.mxu0
    %vm1055 = vcmask 57344
    %1056 = vst.msk [vmem:[#allocation4] sm:$0x1] %vm1055, %v1052
    %s1057 = scalar_lea.vmem %s0, 16
    %v1058 = vld [vmem:[%s1057] sm:$0xff]
    %v1059 = vld [vmem:[%s1057 + $0x8] sm:$0xff]
    %v1060 = vld [vmem:[#allocation2] sm:$0x1]
    %v1062 = vlaneseq
    %v1063 = vshrl.u32 %v1062, 7
    %v1064 = vsub.s32 0, %v1063
    %v1065 = vrot.slane %v1060, %v1064
    %v1067 = vmul.f32 %v1058, %v1065
    %v1068 = vmul.f32 %v1059, %v1065
    %v1069 = vld [vmem:[#allocation3] sm:$0x1]
    %v1071 = vlaneseq
    %v1072 = vshrl.u32 %v1071, 7
    %v1073 = vsub.s32 0, %v1072
    %v1074 = vrot.slane %v1069, %v1073
    %v1076 = vadd.f32 %v1067, %v1074
    %v1077 = vadd.f32 %v1068, %v1074
    %v1080 = vrot.slane %v1076, 7
    %v1081 = vrot.slane %v1077, 7
    %v1082 = vsel %vm102, %v1080, %v1081
    %v1085 = vsel %vm102, 0.0, %v1080
    %v1086 = vsel %vm102, %v1081, 0.0
    %v1087 = vld [vmem:[%s4] sm:$0x1]
    %v1089 = vlaneseq
    %v1090 = vshrl.u32 %v1089, 7
    %v1091 = vsub.s32 0, %v1090
    %v1092 = vrot.slane %v1087, %v1091
    %v1094 = vadd.f32 %v1092, 0.0
    %1096 = vset.pattern.permute.xlu0 0
    %1097 = vperm.xlu0 %1096, %v1085
    %v1098 = vpop.permute.xlu0 %1097
    %1100 = vset.pattern.permute.xlu0 0
    %1101 = vperm.xlu0 %1100, %v1082
    %v1102 = vpop.permute.xlu0 %1101
    %v1104 = vmul.f32 %v1098, %v130
    %v1105 = vmul.f32 %v1102, %v130
    %v1106 = vadd.f32 %v1094, %v1104
    %v1107 = vadd.f32 %v1094, %v1105
    %1109 = vset.pattern.permute.xlu0 0
    %1110 = vperm.xlu0 %1109, %v1086
    %v1111 = vpop.permute.xlu0 %1110
    %v1113 = vmul.f32 %v1098, %v143
    %v1114 = vmul.f32 %v1102, %v143
    %v1115 = vmul.f32 %v1111, %v143
    %v1119 = vrot.slane %v1113, 1
    %v1120 = vrot.slane %v1114, 1
    %v1121 = vsel %vm150, %v1119, %v1120
    %v1122 = vrot.slane %v1115, 1
    %v1123 = vsel %vm150, %v1120, %v1122
    %v1126 = vadd.f32 %v1106, %v1121
    %v1127 = vadd.f32 %v1107, %v1123
    %v1128 = vmul.f32 %v1098, %v163
    %v1129 = vmul.f32 %v1102, %v163
    %v1130 = vmul.f32 %v1111, %v163
    %v1134 = vrot.slane %v1128, 2
    %v1135 = vrot.slane %v1129, 2
    %v1136 = vsel %vm170, %v1134, %v1135
    %v1137 = vrot.slane %v1130, 2
    %v1138 = vsel %vm170, %v1135, %v1137
    %v1141 = vadd.f32 %v1126, %v1136
    %v1142 = vadd.f32 %v1127, %v1138
    %v1143 = vmax.f32 %v1141, 0.0
    %v1144 = vmax.f32 %v1142, 0.0
    %v1146 = vrot.slane %v1143, 1
    %v1148 = vmax.f32 %v1143, %v1146
    %v1150 = vrot.slane %v1144, 1
    %v1152 = vmax.f32 %v1144, %v1150
    %v1154 = vrot.slane %v1148, 1
    %v1156 = vrot.slane %v1148, 2
    %v1158 = vrot.slane %v1148, 3
    %v1161 = vrot.slane %v1152, 4
    %v1163 = vrot.slane %v1152, 5
    %v1165 = vrot.slane %v1152, 6
    %v1167 = vrot.slane %v1152, 7
    %v1169 = vsel %vm102, %v1148, %v1154
    %v1170 = vsel %vm207, %v1169, %v1156
    %v1171 = vsel %vm209, %v1170, %v1158
    %v1172 = vsel %vm211, %v1171, %v1161
    %v1173 = vsel %vm213, %v1172, %v1163
    %v1174 = vsel %vm170, %v1173, %v1165
    %v1175 = vsel %vm150, %v1174, %v1167
    %v1176 = vld [vmem:[%s5] sm:$0x1]
    %v1178 = vlaneseq
    %v1179 = vshrl.u32 %v1178, 7
    %v1180 = vsub.s32 0, %v1179
    %v1181 = vrot.slane %v1176, %v1180
    %v1183 = vmul.f32 %v1175, %v1181
    %v1184 = vld [vmem:[%s6] sm:$0x1]
    %v1186 = vlaneseq
    %v1187 = vshrl.u32 %v1186, 7
    %v1188 = vsub.s32 0, %v1187
    %v1189 = vrot.slane %v1184, %v1188
    %v1191 = vadd.f32 %v1183, %v1189
    %v1193 = vrot.slane %v1191, 7
    %v1195 = vsel %vm102, 0.0, %v1193
    %v1196 = vsel %vm102, %v1193, 0.0
    %v1199 = vrot.slane %v1195, 1
    %v1200 = vrot.slane %v1196, 1
    %v1201 = vsel %vm150, %v1199, %v1200
    %1202 = vrot.lane.b32.xlu0 %v1201, 4
    %v1203 = vpop.permute.xlu0 %1202
    %v1205 = vrot.slane %v1195, 2
    %v1206 = vrot.slane %v1196, 2
    %v1207 = vsel %vm170, %v1205, %v1206
    %1208 = vrot.lane.b32.xlu0 %v1207, 8
    %v1209 = vpop.permute.xlu0 %1208
    %v1211 = vsel %vm252, %v1195, %v1203
    %v1212 = vsel %vm254, %v1211, %v1209
    %v1213 = vld [vmem:[%s7] sm:$0xff]
    %v1214 = vld [vmem:[%s7 + $0x8] sm:$0xf]
    %v1215 = vld [vmem:[%s8] sm:$0x1]
    %v1217 = vlaneseq
    %v1218 = vshrl.u32 %v1217, 7
    %v1219 = vsub.s32 0, %v1218
    %v1220 = vrot.slane %v1215, %v1219
    %v1223 = vsel %vm265, %v1212, 0
    %v1226 = vsel %vm211, %v1214, 0
    %1228 = vmatprep.subr.mxu0 0.0
    %1229 = vmatpush1.msra.mxu0 %v1213
    %1230 = vmatprep.subr.mxu0 0.0
    %1231 = vmatpush1.msra.mxu0 %v1226
    %1232 = vmatprep.subr.mxu0 0.0
    %1233 = vmatpush1.msra.mxu0 0.0
    %1234 = vmatprep.subr.mxu0 0.0
    %1235 = vmatpush1.msra.mxu0 0.0
    %1236 = vmatprep.subr.mxu0 0.0
    %1237 = vmatpush1.msra.mxu0 0.0
    %1238 = vmatprep.subr.mxu0 0.0
    %1239 = vmatpush1.msra.mxu0 0.0
    %1240 = vmatprep.subr.mxu0 0.0
    %1241 = vmatpush1.msra.mxu0 0.0
    %1242 = vmatprep.subr.mxu0 0.0
    %1243 = vmatpush1.msra.mxu0 0.0
    %1244 = vmatprep.subr.mxu0 0.0
    %1245 = vmatpush1.msra.mxu0 0.0
    %1246 = vmatprep.subr.mxu0 0.0
    %1247 = vmatpush1.msra.mxu0 0.0
    %1248 = vmatprep.subr.mxu0 0.0
    %1249 = vmatpush1.msra.mxu0 0.0
    %1250 = vmatprep.subr.mxu0 0.0
    %1251 = vmatpush1.msra.mxu0 0.0
    %1252 = vmatprep.subr.mxu0 0.0
    %1253 = vmatpush1.msra.mxu0 0.0
    %1254 = vmatprep.subr.mxu0 0.0
    %1255 = vmatpush1.msra.mxu0 0.0
    %1256 = vmatprep.subr.mxu0 0.0
    %1257 = vmatpush1.msra.mxu0 0.0
    %1258 = vmatprep.subr.mxu0 0.0
    %1259 = vmatpush1.msra.mxu0 0.0
    %1260 = vmatprep.subr.mxu0 0.0
    %1261 = vmatpush1.msra.mxu0 0.0
    %1262 = vmatprep.subr.mxu0 0.0
    %1263 = vmatpush1.msra.mxu0 0.0
    %1264 = vmatprep.subr.mxu0 0.0
    %1265 = vmatpush1.msra.mxu0 0.0
    %1266 = vmatprep.subr.mxu0 0.0
    %1267 = vmatpush1.msra.mxu0 0.0
    %1268 = vmatprep.subr.mxu0 0.0
    %1269 = vmatpush1.msra.mxu0 0.0
    %1270 = vmatprep.subr.mxu0 0.0
    %1271 = vmatpush1.msra.mxu0 0.0
    %1272 = vmatprep.subr.mxu0 0.0
    %1273 = vmatpush1.msra.mxu0 0.0
    %1274 = vmatprep.subr.mxu0 0.0
    %1275 = vmatpush1.msra.mxu0 0.0
    %1276 = vmatprep.subr.mxu0 0.0
    %1277 = vmatpush1.msra.mxu0 0.0
    %1278 = vmatprep.subr.mxu0 0.0
    %1279 = vmatpush1.msra.mxu0 0.0
    %1280 = vmatprep.subr.mxu0 0.0
    %1281 = vmatpush1.msra.mxu0 0.0
    %1282 = vmatprep.subr.mxu0 0.0
    %1283 = vmatpush1.msra.mxu0 0.0
    %1284 = vmatprep.subr.mxu0 0.0
    %1285 = vmatpush1.msra.mxu0 0.0
    %1286 = vmatprep.subr.mxu0 0.0
    %1287 = vmatpush1.msra.mxu0 0.0
    %1288 = vmatprep.subr.mxu0 0.0
    %1289 = vmatpush1.msra.mxu0 0.0
    %1290 = vmatprep.subr.mxu0 0.0
    %1291 = vmatpush1.msra.mxu0 0.0
    %1292 = vmatprep.mubr.f32.mxu0 0.0
    %1293 = vmatmul.mubr.f32.gmra.mrb[0].mxu0 %v1223
    %v1294 = vpop.f32.mrb[0].mxu0
    %v1295 = vadd.f32 %v1220, %v1294
    %v1296 = vpop.f32.mrb[0].mxu0
    %1297 = vdwg.mxu0
    %v1298 = vmax.f32 %v1295, 0.0
    %v1300 = vrot.slane %v1298, 7
    %v1302 = vsel %vm102, 0.0, %v1300
    %v1303 = vsel %vm102, %v1300, 0.0
    %v1306 = vrot.slane %v1302, 1
    %v1307 = vrot.slane %v1303, 1
    %v1308 = vsel %vm150, %v1306, %v1307
    %1309 = vrot.lane.b32.xlu0 %v1308, 8
    %v1310 = vpop.permute.xlu0 %1309
    %v1312 = vrot.slane %v1302, 2
    %v1313 = vrot.slane %v1303, 2
    %v1314 = vsel %vm170, %v1312, %v1313
    %1315 = vrot.lane.b32.xlu0 %v1314, 16
    %v1316 = vpop.permute.xlu0 %1315
    %v1318 = vsel %vm254, %v1302, %v1310
    %v1319 = vsel %vm363, %v1318, %v1316
    %v1320 = vld [vmem:[%s9] sm:$0xff]
    %v1321 = vld [vmem:[%s9 + $0x8] sm:$0xff]
    %v1322 = vld [vmem:[%s9 + $0x10] sm:$0xff]
    %v1323 = vld [vmem:[%s10] sm:$0x1]
    %v1325 = vlaneseq
    %v1326 = vshrl.u32 %v1325, 7
    %v1327 = vsub.s32 0, %v1326
    %v1328 = vrot.slane %v1323, %v1327
    %v1331 = vsel %vm375, %v1319, 0
    %1333 = vmatprep.subr.mxu0 0.0
    %1334 = vmatpush1.msra.mxu0 %v1320
    %1335 = vmatprep.subr.mxu0 0.0
    %1336 = vmatpush1.msra.mxu0 %v1321
    %1337 = vmatprep.subr.mxu0 0.0
    %1338 = vmatpush1.msra.mxu0 %v1322
    %1339 = vmatprep.subr.mxu0 0.0
    %1340 = vmatpush1.msra.mxu0 0.0
    %1341 = vmatprep.subr.mxu0 0.0
    %1342 = vmatpush1.msra.mxu0 0.0
    %1343 = vmatprep.subr.mxu0 0.0
    %1344 = vmatpush1.msra.mxu0 0.0
    %1345 = vmatprep.subr.mxu0 0.0
    %1346 = vmatpush1.msra.mxu0 0.0
    %1347 = vmatprep.subr.mxu0 0.0
    %1348 = vmatpush1.msra.mxu0 0.0
    %1349 = vmatprep.subr.mxu0 0.0
    %1350 = vmatpush1.msra.mxu0 0.0
    %1351 = vmatprep.subr.mxu0 0.0
    %1352 = vmatpush1.msra.mxu0 0.0
    %1353 = vmatprep.subr.mxu0 0.0
    %1354 = vmatpush1.msra.mxu0 0.0
    %1355 = vmatprep.subr.mxu0 0.0
    %1356 = vmatpush1.msra.mxu0 0.0
    %1357 = vmatprep.subr.mxu0 0.0
    %1358 = vmatpush1.msra.mxu0 0.0
    %1359 = vmatprep.subr.mxu0 0.0
    %1360 = vmatpush1.msra.mxu0 0.0
    %1361 = vmatprep.subr.mxu0 0.0
    %1362 = vmatpush1.msra.mxu0 0.0
    %1363 = vmatprep.subr.mxu0 0.0
    %1364 = vmatpush1.msra.mxu0 0.0
    %1365 = vmatprep.subr.mxu0 0.0
    %1366 = vmatpush1.msra.mxu0 0.0
    %1367 = vmatprep.subr.mxu0 0.0
    %1368 = vmatpush1.msra.mxu0 0.0
    %1369 = vmatprep.subr.mxu0 0.0
    %1370 = vmatpush1.msra.mxu0 0.0
    %1371 = vmatprep.subr.mxu0 0.0
    %1372 = vmatpush1.msra.mxu0 0.0
    %1373 = vmatprep.subr.mxu0 0.0
    %1374 = vmatpush1.msra.mxu0 0.0
    %1375 = vmatprep.subr.mxu0 0.0
    %1376 = vmatpush1.msra.mxu0 0.0
    %1377 = vmatprep.subr.mxu0 0.0
    %1378 = vmatpush1.msra.mxu0 0.0
    %1379 = vmatprep.subr.mxu0 0.0
    %1380 = vmatpush1.msra.mxu0 0.0
    %1381 = vmatprep.subr.mxu0 0.0
    %1382 = vmatpush1.msra.mxu0 0.0
    %1383 = vmatprep.subr.mxu0 0.0
    %1384 = vmatpush1.msra.mxu0 0.0
    %1385 = vmatprep.subr.mxu0 0.0
    %1386 = vmatpush1.msra.mxu0 0.0
    %1387 = vmatprep.subr.mxu0 0.0
    %1388 = vmatpush1.msra.mxu0 0.0
    %1389 = vmatprep.subr.mxu0 0.0
    %1390 = vmatpush1.msra.mxu0 0.0
    %1391 = vmatprep.subr.mxu0 0.0
    %1392 = vmatpush1.msra.mxu0 0.0
    %1393 = vmatprep.subr.mxu0 0.0
    %1394 = vmatpush1.msra.mxu0 0.0
    %1395 = vmatprep.subr.mxu0 0.0
    %1396 = vmatpush1.msra.mxu0 0.0
    %1397 = vmatprep.mubr.f32.mxu0 0.0
    %1398 = vmatmul.mubr.f32.gmra.mrb[0].mxu0 %v1331
    %v1399 = vpop.f32.mrb[0].mxu0
    %v1400 = vadd.f32 %v1328, %v1399
    %v1401 = vpop.f32.mrb[0].mxu0
    %1402 = vdwg.mxu0
    %v1403 = vmax.f32 %v1400, 0.0
    %v1405 = vrot.slane %v1403, 1
    %v1407 = vmax.f32 %v1403, %v1405
    %v1409 = vrot.slane %v1407, 1
    %v1411 = vrot.slane %v1407, 2
    %v1413 = vrot.slane %v1407, 3
    %v1415 = vsel %vm102, %v1407, %v1409
    %v1416 = vsel %vm207, %v1415, %v1411
    %v1417 = vsel %vm209, %v1416, %v1413
    %v1418 = vld [vmem:[%s11] sm:$0x1]
    %v1420 = vlaneseq
    %v1421 = vshrl.u32 %v1420, 7
    %v1422 = vsub.s32 0, %v1421
    %v1423 = vrot.slane %v1418, %v1422
    %v1425 = vmul.f32 %v1417, %v1423
    %v1426 = vld [vmem:[%s12] sm:$0x1]
    %v1428 = vlaneseq
    %v1429 = vshrl.u32 %v1428, 7
    %v1430 = vsub.s32 0, %v1429
    %v1431 = vrot.slane %v1426, %v1430
    %v1433 = vadd.f32 %v1425, %v1431
    %v1435 = vrot.slane %v1433, 7
    %v1437 = vsel %vm102, 0.0, %v1435
    %v1438 = vsel %vm213, %v1437, 0.0
    %v1440 = vrot.slane %v1438, 1
    %1441 = vrot.lane.b32.xlu0 %v1440, 16
    %v1442 = vpop.permute.xlu0 %1441
    %v1444 = vrot.slane %v1438, 2
    %1445 = vrot.lane.b32.xlu0 %v1444, 32
    %v1446 = vpop.permute.xlu0 %1445
    %v1448 = vsel %vm363, %v1438, %v1442
    %v1449 = vsel %vm495, %v1448, %v1446
    %v1450 = vld [vmem:[%s13] sm:$0xff]
    %v1451 = vld [vmem:[%s13 + $0x8] sm:$0xff]
    %v1452 = vld [vmem:[%s13 + $0x10] sm:$0xff]
    %v1453 = vld [vmem:[%s13 + $0x18] sm:$0xff]
    %v1454 = vld [vmem:[%s13 + $0x20] sm:$0xff]
    %v1455 = vld [vmem:[%s13 + $0x28] sm:$0xff]
    %v1456 = vld [vmem:[%s14] sm:$0x1]
    %v1458 = vlaneseq
    %v1459 = vshrl.u32 %v1458, 7
    %v1460 = vsub.s32 0, %v1459
    %v1461 = vrot.slane %v1456, %v1460
    %v1464 = vsel %vm510, %v1449, 0
    %1466 = vmatprep.subr.mxu0 0.0
    %1467 = vmatpush1.msra.mxu0 %v1450
    %1468 = vmatprep.subr.mxu0 0.0
    %1469 = vmatpush1.msra.mxu0 %v1451
    %1470 = vmatprep.subr.mxu0 0.0
    %1471 = vmatpush1.msra.mxu0 %v1452
    %1472 = vmatprep.subr.mxu0 0.0
    %1473 = vmatpush1.msra.mxu0 %v1453
    %1474 = vmatprep.subr.mxu0 0.0
    %1475 = vmatpush1.msra.mxu0 %v1454
    %1476 = vmatprep.subr.mxu0 0.0
    %1477 = vmatpush1.msra.mxu0 %v1455
    %1478 = vmatprep.subr.mxu0 0.0
    %1479 = vmatpush1.msra.mxu0 0.0
    %1480 = vmatprep.subr.mxu0 0.0
    %1481 = vmatpush1.msra.mxu0 0.0
    %1482 = vmatprep.subr.mxu0 0.0
    %1483 = vmatpush1.msra.mxu0 0.0
    %1484 = vmatprep.subr.mxu0 0.0
    %1485 = vmatpush1.msra.mxu0 0.0
    %1486 = vmatprep.subr.mxu0 0.0
    %1487 = vmatpush1.msra.mxu0 0.0
    %1488 = vmatprep.subr.mxu0 0.0
    %1489 = vmatpush1.msra.mxu0 0.0
    %1490 = vmatprep.subr.mxu0 0.0
    %1491 = vmatpush1.msra.mxu0 0.0
    %1492 = vmatprep.subr.mxu0 0.0
    %1493 = vmatpush1.msra.mxu0 0.0
    %1494 = vmatprep.subr.mxu0 0.0
    %1495 = vmatpush1.msra.mxu0 0.0
    %1496 = vmatprep.subr.mxu0 0.0
    %1497 = vmatpush1.msra.mxu0 0.0
    %1498 = vmatprep.subr.mxu0 0.0
    %1499 = vmatpush1.msra.mxu0 0.0
    %1500 = vmatprep.subr.mxu0 0.0
    %1501 = vmatpush1.msra.mxu0 0.0
    %1502 = vmatprep.subr.mxu0 0.0
    %1503 = vmatpush1.msra.mxu0 0.0
    %1504 = vmatprep.subr.mxu0 0.0
    %1505 = vmatpush1.msra.mxu0 0.0
    %1506 = vmatprep.subr.mxu0 0.0
    %1507 = vmatpush1.msra.mxu0 0.0
    %1508 = vmatprep.subr.mxu0 0.0
    %1509 = vmatpush1.msra.mxu0 0.0
    %1510 = vmatprep.subr.mxu0 0.0
    %1511 = vmatpush1.msra.mxu0 0.0
    %1512 = vmatprep.subr.mxu0 0.0
    %1513 = vmatpush1.msra.mxu0 0.0
    %1514 = vmatprep.subr.mxu0 0.0
    %1515 = vmatpush1.msra.mxu0 0.0
    %1516 = vmatprep.subr.mxu0 0.0
    %1517 = vmatpush1.msra.mxu0 0.0
    %1518 = vmatprep.subr.mxu0 0.0
    %1519 = vmatpush1.msra.mxu0 0.0
    %1520 = vmatprep.subr.mxu0 0.0
    %1521 = vmatpush1.msra.mxu0 0.0
    %1522 = vmatprep.subr.mxu0 0.0
    %1523 = vmatpush1.msra.mxu0 0.0
    %1524 = vmatprep.subr.mxu0 0.0
    %1525 = vmatpush1.msra.mxu0 0.0
    %1526 = vmatprep.subr.mxu0 0.0
    %1527 = vmatpush1.msra.mxu0 0.0
    %1528 = vmatprep.subr.mxu0 0.0
    %1529 = vmatpush1.msra.mxu0 0.0
    %1530 = vmatprep.mubr.f32.mxu0 0.0
    %1531 = vmatmul.mubr.f32.gmra.mrb[0].mxu0 %v1464
    %v1532 = vpop.f32.mrb[0].mxu0
    %v1533 = vadd.f32 %v1461, %v1532
    %v1534 = vpop.f32.mrb[0].mxu0
    %1535 = vdwg.mxu0
    %v1536 = vmax.f32 %v1533, 0.0
    %v1538 = vrot.slane %v1536, 7
    %v1540 = vsel %vm102, 0.0, %v1538
    %v1541 = vsel %vm213, %v1540, 0.0
    %v1543 = vrot.slane %v1541, 1
    %1544 = vrot.lane.b32.xlu0 %v1543, 32
    %v1545 = vpop.permute.xlu0 %1544
    %v1547 = vrot.slane %v1541, 2
    %1548 = vrot.lane.b32.xlu0 %v1547, 64
    %v1549 = vpop.permute.xlu0 %1548
    %v1551 = vsel %vm495, %v1541, %v1545
    %v1552 = vsel %vm600, %v1551, %v1549
    %v1553 = vld [vmem:[%s15] sm:$0xff]
    %v1554 = vld [vmem:[%s15 + $0x8] sm:$0xff]
    %v1555 = vld [vmem:[%s15 + $0x10] sm:$0xff]
    %v1556 = vld [vmem:[%s15 + $0x18] sm:$0xff]
    %v1557 = vld [vmem:[%s15 + $0x20] sm:$0xff]
    %v1558 = vld [vmem:[%s15 + $0x28] sm:$0xff]
    %v1559 = vld [vmem:[%s15 + $0x30] sm:$0xff]
    %v1560 = vld [vmem:[%s15 + $0x38] sm:$0xff]
    %v1561 = vld [vmem:[%s15 + $0x40] sm:$0xff]
    %v1562 = vld [vmem:[%s15 + $0x48] sm:$0xff]
    %v1563 = vld [vmem:[%s15 + $0x50] sm:$0xff]
    %v1564 = vld [vmem:[%s15 + $0x58] sm:$0xff]
    %v1565 = vld [vmem:[%s16] sm:$0x1]
    %v1567 = vlaneseq
    %v1568 = vshrl.u32 %v1567, 7
    %v1569 = vsub.s32 0, %v1568
    %v1570 = vrot.slane %v1565, %v1569
    %v1573 = vsel %vm621, %v1552, 0
    %1575 = vmatprep.subr.mxu0 0.0
    %1576 = vmatpush1.msra.mxu0 %v1553
    %1577 = vmatprep.subr.mxu0 0.0
    %1578 = vmatpush1.msra.mxu0 %v1554
    %1579 = vmatprep.subr.mxu0 0.0
    %1580 = vmatpush1.msra.mxu0 %v1555
    %1581 = vmatprep.subr.mxu0 0.0
    %1582 = vmatpush1.msra.mxu0 %v1556
    %1583 = vmatprep.subr.mxu0 0.0
    %1584 = vmatpush1.msra.mxu0 %v1557
    %1585 = vmatprep.subr.mxu0 0.0
    %1586 = vmatpush1.msra.mxu0 %v1558
    %1587 = vmatprep.subr.mxu0 0.0
    %1588 = vmatpush1.msra.mxu0 %v1559
    %1589 = vmatprep.subr.mxu0 0.0
    %1590 = vmatpush1.msra.mxu0 %v1560
    %1591 = vmatprep.subr.mxu0 0.0
    %1592 = vmatpush1.msra.mxu0 %v1561
    %1593 = vmatprep.subr.mxu0 0.0
    %1594 = vmatpush1.msra.mxu0 %v1562
    %1595 = vmatprep.subr.mxu0 0.0
    %1596 = vmatpush1.msra.mxu0 %v1563
    %1597 = vmatprep.subr.mxu0 0.0
    %1598 = vmatpush1.msra.mxu0 %v1564
    %1599 = vmatprep.subr.mxu0 0.0
    %1600 = vmatpush1.msra.mxu0 0.0
    %1601 = vmatprep.subr.mxu0 0.0
    %1602 = vmatpush1.msra.mxu0 0.0
    %1603 = vmatprep.subr.mxu0 0.0
    %1604 = vmatpush1.msra.mxu0 0.0
    %1605 = vmatprep.subr.mxu0 0.0
    %1606 = vmatpush1.msra.mxu0 0.0
    %1607 = vmatprep.subr.mxu0 0.0
    %1608 = vmatpush1.msra.mxu0 0.0
    %1609 = vmatprep.subr.mxu0 0.0
    %1610 = vmatpush1.msra.mxu0 0.0
    %1611 = vmatprep.subr.mxu0 0.0
    %1612 = vmatpush1.msra.mxu0 0.0
    %1613 = vmatprep.subr.mxu0 0.0
    %1614 = vmatpush1.msra.mxu0 0.0
    %1615 = vmatprep.subr.mxu0 0.0
    %1616 = vmatpush1.msra.mxu0 0.0
    %1617 = vmatprep.subr.mxu0 0.0
    %1618 = vmatpush1.msra.mxu0 0.0
    %1619 = vmatprep.subr.mxu0 0.0
    %1620 = vmatpush1.msra.mxu0 0.0
    %1621 = vmatprep.subr.mxu0 0.0
    %1622 = vmatpush1.msra.mxu0 0.0
    %1623 = vmatprep.subr.mxu0 0.0
    %1624 = vmatpush1.msra.mxu0 0.0
    %1625 = vmatprep.subr.mxu0 0.0
    %1626 = vmatpush1.msra.mxu0 0.0
    %1627 = vmatprep.subr.mxu0 0.0
    %1628 = vmatpush1.msra.mxu0 0.0
    %1629 = vmatprep.subr.mxu0 0.0
    %1630 = vmatpush1.msra.mxu0 0.0
    %1631 = vmatprep.subr.mxu0 0.0
    %1632 = vmatpush1.msra.mxu0 0.0
    %1633 = vmatprep.subr.mxu0 0.0
    %1634 = vmatpush1.msra.mxu0 0.0
    %1635 = vmatprep.subr.mxu0 0.0
    %1636 = vmatpush1.msra.mxu0 0.0
    %1637 = vmatprep.subr.mxu0 0.0
    %1638 = vmatpush1.msra.mxu0 0.0
    %1639 = vmatprep.mubr.f32.mxu0 0.0
    %1640 = vmatmul.mubr.f32.gmra.mrb[0].mxu0 %v1573
    %v1641 = vpop.f32.mrb[0].mxu0
    %v1642 = vadd.f32 %v1570, %v1641
    %v1643 = vpop.f32.mrb[0].mxu0
    %1644 = vdwg.mxu0
    %v1645 = vmax.f32 %v1642, 0.0
    %v1647 = vrot.slane %v1645, 1
    %v1649 = vmax.f32 %v1645, %v1647
    %v1651 = vrot.slane %v1649, 1
    %v1653 = vsel %vm102, %v1649, %v1651
    %v1654 = vld [vmem:[%s17] sm:$0x1]
    %v1656 = vlaneseq
    %v1657 = vshrl.u32 %v1656, 7
    %v1658 = vsub.s32 0, %v1657
    %v1659 = vrot.slane %v1654, %v1658
    %v1661 = vmul.f32 %v1653, %v1659
    %v1662 = vld [vmem:[%s18] sm:$0x1]
    %v1664 = vlaneseq
    %v1665 = vshrl.u32 %v1664, 7
    %v1666 = vsub.s32 0, %v1665
    %v1667 = vrot.slane %v1662, %v1666
    %v1669 = vadd.f32 %v1661, %v1667
    %v1670 = vld [vmem:[%s20] sm:$0x3]
    %v1671 = vld [vmem:[%s19] sm:$0xff]
    %v1672 = vld [vmem:[%s19 + $0x8] sm:$0xff]
    %v1673 = vld [vmem:[%s19 + $0x10] sm:$0xff]
    %v1674 = vld [vmem:[%s19 + $0x18] sm:$0xff]
    %v1675 = vld [vmem:[%s19 + $0x20] sm:$0xff]
    %v1676 = vld [vmem:[%s19 + $0x28] sm:$0xff]
    %v1677 = vld [vmem:[%s19 + $0x30] sm:$0xff]
    %v1678 = vld [vmem:[%s19 + $0x38] sm:$0xff]
    %v1679 = vld [vmem:[%s19 + $0x40] sm:$0xff]
    %v1680 = vld [vmem:[%s19 + $0x48] sm:$0xff]
    %v1681 = vld [vmem:[%s19 + $0x50] sm:$0xff]
    %v1682 = vld [vmem:[%s19 + $0x58] sm:$0xff]
    %v1683 = vld [vmem:[%s19 + $0x60] sm:$0xff]
    %v1684 = vld [vmem:[%s19 + $0x68] sm:$0xff]
    %v1685 = vld [vmem:[%s19 + $0x70] sm:$0xff]
    %v1686 = vld [vmem:[%s19 + $0x78] sm:$0xff]
    %v1688 = vsel %vm600, %v1669, 0
    %1690 = vmatprep.subr.mxu0 %v1672
    %1691 = vmatpush1.msra.mxu0 %v1671
    %1692 = vmatprep.subr.mxu0 %v1674
    %1693 = vmatpush1.msra.mxu0 %v1673
    %1694 = vmatprep.subr.mxu0 %v1676
    %1695 = vmatpush1.msra.mxu0 %v1675
    %1696 = vmatprep.subr.mxu0 %v1678
    %1697 = vmatpush1.msra.mxu0 %v1677
    %1698 = vmatprep.subr.mxu0 %v1680
    %1699 = vmatpush1.msra.mxu0 %v1679
    %1700 = vmatprep.subr.mxu0 %v1682
    %1701 = vmatpush1.msra.mxu0 %v1681
    %1702 = vmatprep.subr.mxu0 %v1684
    %1703 = vmatpush1.msra.mxu0 %v1683
    %1704 = vmatprep.subr.mxu0 %v1686
    %1705 = vmatpush1.msra.mxu0 %v1685
    %1706 = vmatprep.subr.mxu0 0.0
    %1707 = vmatpush1.msra.mxu0 0.0
    %1708 = vmatprep.subr.mxu0 0.0
    %1709 = vmatpush1.msra.mxu0 0.0
    %1710 = vmatprep.subr.mxu0 0.0
    %1711 = vmatpush1.msra.mxu0 0.0
    %1712 = vmatprep.subr.mxu0 0.0
    %1713 = vmatpush1.msra.mxu0 0.0
    %1714 = vmatprep.subr.mxu0 0.0
    %1715 = vmatpush1.msra.mxu0 0.0
    %1716 = vmatprep.subr.mxu0 0.0
    %1717 = vmatpush1.msra.mxu0 0.0
    %1718 = vmatprep.subr.mxu0 0.0
    %1719 = vmatpush1.msra.mxu0 0.0
    %1720 = vmatprep.subr.mxu0 0.0
    %1721 = vmatpush1.msra.mxu0 0.0
    %1722 = vmatprep.subr.mxu0 0.0
    %1723 = vmatpush1.msra.mxu0 0.0
    %1724 = vmatprep.subr.mxu0 0.0
    %1725 = vmatpush1.msra.mxu0 0.0
    %1726 = vmatprep.subr.mxu0 0.0
    %1727 = vmatpush1.msra.mxu0 0.0
    %1728 = vmatprep.subr.mxu0 0.0
    %1729 = vmatpush1.msra.mxu0 0.0
    %1730 = vmatprep.subr.mxu0 0.0
    %1731 = vmatpush1.msra.mxu0 0.0
    %1732 = vmatprep.subr.mxu0 0.0
    %1733 = vmatpush1.msra.mxu0 0.0
    %1734 = vmatprep.subr.mxu0 0.0
    %1735 = vmatpush1.msra.mxu0 0.0
    %1736 = vmatprep.subr.mxu0 0.0
    %1737 = vmatpush1.msra.mxu0 0.0
    %1738 = vmatprep.subr.mxu0 0.0
    %1739 = vmatpush1.msra.mxu0 0.0
    %1740 = vmatprep.subr.mxu0 0.0
    %1741 = vmatpush1.msra.mxu0 0.0
    %1742 = vmatprep.subr.mxu0 0.0
    %1743 = vmatpush1.msra.mxu0 0.0
    %1744 = vmatprep.subr.mxu0 0.0
    %1745 = vmatpush1.msra.mxu0 0.0
    %1746 = vmatprep.subr.mxu0 0.0
    %1747 = vmatpush1.msra.mxu0 0.0
    %1748 = vmatprep.subr.mxu0 0.0
    %1749 = vmatpush1.msra.mxu0 0.0
    %1750 = vmatprep.subr.mxu0 0.0
    %1751 = vmatpush1.msra.mxu0 0.0
    %1752 = vmatprep.subr.mxu0 0.0
    %1753 = vmatpush1.msra.mxu0 0.0
    %1754 = vmatprep.mubr.f32.mxu0 0.0
    %1755 = vmatmul.mubr.f32.gmra.mrb[0].mxu0 %v1688
    %v1756 = vpop.f32.mrb[0].mxu0
    %v1757 = vadd.f32 0.0, %v1756
    %v1758 = vpop.f32.mrb[0].mxu0
    %v1759 = vadd.f32 0.0, %v1758
    %1760 = vdwg.mxu0
    %v1763 = vcombine.low %v1757, %v1759
    %v1765 = vunpack.c.l.s4 1966171168
    %v1766 = vunpack.c.0.s8 %v1765
    %v1767 = vlaneseq
    %v1768 = vshrl.u32 %v1767, 7
    %v1769 = vsub.s32 %v1766, %v1768
    %v1770 = vrot.slane %v1763, %v1769
    %v1772 = vunpack.c.l.s4 1966171168
    %v1773 = vunpack.c.0.s8 %v1772
    %v1774 = vlaneseq
    %v1775 = vshrl.u32 %v1774, 7
    %v1776 = vsub.s32 %v1773, %v1775
    %v1777 = vrot.slane %v1770, %v1776
    %v1779 = vadd.f32 %v1670, %v1777
    %v1780 = vld [vmem:[%s830] sm:$0xff]
    %v1781 = vld [vmem:[%s830 + $0x8] sm:$0xff]
    %v1782 = vld [vmem:[%s830 + $0x10] sm:$0xff]
    %v1783 = vld [vmem:[%s830 + $0x18] sm:$0xff]
    %v1784 = vld [vmem:[%s830 + $0x20] sm:$0xff]
    %v1785 = vld [vmem:[%s830 + $0x28] sm:$0xff]
    %v1786 = vld [vmem:[%s830 + $0x30] sm:$0xff]
    %v1787 = vld [vmem:[%s830 + $0x38] sm:$0xff]
    %v1788 = vld [vmem:[%s830 + $0x40] sm:$0xff]
    %v1789 = vld [vmem:[%s830 + $0x48] sm:$0xff]
    %v1790 = vld [vmem:[%s830 + $0x50] sm:$0xff]
    %v1791 = vld [vmem:[%s830 + $0x58] sm:$0xff]
    %v1792 = vld [vmem:[%s830 + $0x60] sm:$0xff]
    %v1793 = vld [vmem:[%s830 + $0x68] sm:$0xff]
    %v1794 = vld [vmem:[%s830 + $0x70] sm:$0xff]
    %v1795 = vld [vmem:[%s830 + $0x78] sm:$0xff]
    %v1796 = vrot.slane %v1669, 1
    %v1797 = vsel %vm600, %v1796, 0
    %1799 = vmatprep.subr.mxu0 %v1781
    %1800 = vmatpush1.msra.mxu0 %v1780
    %1801 = vmatprep.subr.mxu0 %v1783
    %1802 = vmatpush1.msra.mxu0 %v1782
    %1803 = vmatprep.subr.mxu0 %v1785
    %1804 = vmatpush1.msra.mxu0 %v1784
    %1805 = vmatprep.subr.mxu0 %v1787
    %1806 = vmatpush1.msra.mxu0 %v1786
    %1807 = vmatprep.subr.mxu0 %v1789
    %1808 = vmatpush1.msra.mxu0 %v1788
    %1809 = vmatprep.subr.mxu0 %v1791
    %1810 = vmatpush1.msra.mxu0 %v1790
    %1811 = vmatprep.subr.mxu0 %v1793
    %1812 = vmatpush1.msra.mxu0 %v1792
    %1813 = vmatprep.subr.mxu0 %v1795
    %1814 = vmatpush1.msra.mxu0 %v1794
    %1815 = vmatprep.subr.mxu0 0.0
    %1816 = vmatpush1.msra.mxu0 0.0
    %1817 = vmatprep.subr.mxu0 0.0
    %1818 = vmatpush1.msra.mxu0 0.0
    %1819 = vmatprep.subr.mxu0 0.0
    %1820 = vmatpush1.msra.mxu0 0.0
    %1821 = vmatprep.subr.mxu0 0.0
    %1822 = vmatpush1.msra.mxu0 0.0
    %1823 = vmatprep.subr.mxu0 0.0
    %1824 = vmatpush1.msra.mxu0 0.0
    %1825 = vmatprep.subr.mxu0 0.0
    %1826 = vmatpush1.msra.mxu0 0.0
    %1827 = vmatprep.subr.mxu0 0.0
    %1828 = vmatpush1.msra.mxu0 0.0
    %1829 = vmatprep.subr.mxu0 0.0
    %1830 = vmatpush1.msra.mxu0 0.0
    %1831 = vmatprep.subr.mxu0 0.0
    %1832 = vmatpush1.msra.mxu0 0.0
    %1833 = vmatprep.subr.mxu0 0.0
    %1834 = vmatpush1.msra.mxu0 0.0
    %1835 = vmatprep.subr.mxu0 0.0
    %1836 = vmatpush1.msra.mxu0 0.0
    %1837 = vmatprep.subr.mxu0 0.0
    %1838 = vmatpush1.msra.mxu0 0.0
    %1839 = vmatprep.subr.mxu0 0.0
    %1840 = vmatpush1.msra.mxu0 0.0
    %1841 = vmatprep.subr.mxu0 0.0
    %1842 = vmatpush1.msra.mxu0 0.0
    %1843 = vmatprep.subr.mxu0 0.0
    %1844 = vmatpush1.msra.mxu0 0.0
    %1845 = vmatprep.subr.mxu0 0.0
    %1846 = vmatpush1.msra.mxu0 0.0
    %1847 = vmatprep.subr.mxu0 0.0
    %1848 = vmatpush1.msra.mxu0 0.0
    %1849 = vmatprep.subr.mxu0 0.0
    %1850 = vmatpush1.msra.mxu0 0.0
    %1851 = vmatprep.subr.mxu0 0.0
    %1852 = vmatpush1.msra.mxu0 0.0
    %1853 = vmatprep.subr.mxu0 0.0
    %1854 = vmatpush1.msra.mxu0 0.0
    %1855 = vmatprep.subr.mxu0 0.0
    %1856 = vmatpush1.msra.mxu0 0.0
    %1857 = vmatprep.subr.mxu0 0.0
    %1858 = vmatpush1.msra.mxu0 0.0
    %1859 = vmatprep.subr.mxu0 0.0
    %1860 = vmatpush1.msra.mxu0 0.0
    %1861 = vmatprep.subr.mxu0 0.0
    %1862 = vmatpush1.msra.mxu0 0.0
    %1863 = vmatprep.mubr.f32.mxu0 0.0
    %1864 = vmatmul.mubr.f32.gmra.mrb[0].mxu0 %v1797
    %v1865 = vpop.f32.mrb[0].mxu0
    %v1866 = vadd.f32 0.0, %v1865
    %v1867 = vpop.f32.mrb[0].mxu0
    %v1868 = vadd.f32 0.0, %v1867
    %1869 = vdwg.mxu0
    %v1872 = vcombine.low %v1866, %v1868
    %v1874 = vunpack.c.l.s4 1966171168
    %v1875 = vunpack.c.0.s8 %v1874
    %v1876 = vlaneseq
    %v1877 = vshrl.u32 %v1876, 7
    %v1878 = vsub.s32 %v1875, %v1877
    %v1879 = vrot.slane %v1872, %v1878
    %v1881 = vunpack.c.l.s4 1966171168
    %v1882 = vunpack.c.0.s8 %v1881
    %v1883 = vlaneseq
    %v1884 = vshrl.u32 %v1883, 7
    %v1885 = vsub.s32 %v1882, %v1884
    %v1886 = vrot.slane %v1879, %v1885
    %v1888 = vadd.f32 %v1779, %v1886
    %v1889 = vmax.f32 %v1888, 0.0
    %v1890 = vld [vmem:[%s21] sm:$0xff]
    %v1891 = vld [vmem:[%s21 + $0x8] sm:$0xff]
    %v1892 = vld [vmem:[%s21 + $0x10] sm:$0xff]
    %v1893 = vld [vmem:[%s21 + $0x18] sm:$0xff]
    %v1894 = vld [vmem:[%s21 + $0x20] sm:$0xff]
    %v1895 = vld [vmem:[%s21 + $0x28] sm:$0xff]
    %v1896 = vld [vmem:[%s21 + $0x30] sm:$0xff]
    %v1897 = vld [vmem:[%s21 + $0x38] sm:$0xff]
    %v1898 = vld [vmem:[%s21 + $0x40] sm:$0xff]
    %v1899 = vld [vmem:[%s21 + $0x48] sm:$0xff]
    %v1900 = vld [vmem:[%s21 + $0x50] sm:$0xff]
    %v1901 = vld [vmem:[%s21 + $0x58] sm:$0xff]
    %v1902 = vld [vmem:[%s21 + $0x60] sm:$0xff]
    %v1903 = vld [vmem:[%s21 + $0x68] sm:$0xff]
    %v1904 = vld [vmem:[%s21 + $0x70] sm:$0xff]
    %v1905 = vld [vmem:[%s21 + $0x78] sm:$0xff]
    %v1906 = vld [vmem:[%s21 + $0x80] sm:$0xff]
    %v1907 = vld [vmem:[%s21 + $0x88] sm:$0xff]
    %v1908 = vld [vmem:[%s21 + $0x90] sm:$0xff]
    %v1909 = vld [vmem:[%s21 + $0x98] sm:$0xff]
    %v1910 = vld [vmem:[%s21 + $0xa0] sm:$0xff]
    %v1911 = vld [vmem:[%s21 + $0xa8] sm:$0xff]
    %v1912 = vld [vmem:[%s21 + $0xb0] sm:$0xff]
    %v1913 = vld [vmem:[%s21 + $0xb8] sm:$0xff]
    %v1914 = vld [vmem:[%s21 + $0xc0] sm:$0xff]
    %v1915 = vld [vmem:[%s21 + $0xc8] sm:$0xff]
    %v1916 = vld [vmem:[%s21 + $0xd0] sm:$0xff]
    %v1917 = vld [vmem:[%s21 + $0xd8] sm:$0xff]
    %v1918 = vld [vmem:[%s21 + $0xe0] sm:$0xff]
    %v1919 = vld [vmem:[%s21 + $0xe8] sm:$0xff]
    %v1920 = vld [vmem:[%s21 + $0xf0] sm:$0xff]
    %v1921 = vld [vmem:[%s21 + $0xf8] sm:$0xff]
    %v1922 = vld [vmem:[%s22] sm:$0x1]
    %v1924 = vlaneseq
    %v1925 = vshrl.u32 %v1924, 7
    %v1926 = vsub.s32 0, %v1925
    %v1927 = vrot.slane %v1889, %v1926
    %v1928 = vlaneseq
    %v1929 = vshrl.u32 %v1928, 7
    %v1930 = vsub.s32 1, %v1929
    %v1931 = vrot.slane %v1889, %v1930
    %1934 = vmatprep.subr.mxu0 0.0
    %1935 = vmatpush1.msra.mxu0 %v1890
    %1936 = vmatprep.subr.mxu0 0.0
    %1937 = vmatpush1.msra.mxu0 %v1891
    %1938 = vmatprep.subr.mxu0 0.0
    %1939 = vmatpush1.msra.mxu0 %v1892
    %1940 = vmatprep.subr.mxu0 0.0
    %1941 = vmatpush1.msra.mxu0 %v1893
    %1942 = vmatprep.subr.mxu0 0.0
    %1943 = vmatpush1.msra.mxu0 %v1894
    %1944 = vmatprep.subr.mxu0 0.0
    %1945 = vmatpush1.msra.mxu0 %v1895
    %1946 = vmatprep.subr.mxu0 0.0
    %1947 = vmatpush1.msra.mxu0 %v1896
    %1948 = vmatprep.subr.mxu0 0.0
    %1949 = vmatpush1.msra.mxu0 %v1897
    %1950 = vmatprep.subr.mxu0 0.0
    %1951 = vmatpush1.msra.mxu0 %v1898
    %1952 = vmatprep.subr.mxu0 0.0
    %1953 = vmatpush1.msra.mxu0 %v1899
    %1954 = vmatprep.subr.mxu0 0.0
    %1955 = vmatpush1.msra.mxu0 %v1900
    %1956 = vmatprep.subr.mxu0 0.0
    %1957 = vmatpush1.msra.mxu0 %v1901
    %1958 = vmatprep.subr.mxu0 0.0
    %1959 = vmatpush1.msra.mxu0 %v1902
    %1960 = vmatprep.subr.mxu0 0.0
    %1961 = vmatpush1.msra.mxu0 %v1903
    %1962 = vmatprep.subr.mxu0 0.0
    %1963 = vmatpush1.msra.mxu0 %v1904
    %1964 = vmatprep.subr.mxu0 0.0
    %1965 = vmatpush1.msra.mxu0 %v1905
    %1966 = vmatprep.subr.mxu0 0.0
    %1967 = vmatpush1.msra.mxu0 %v1906
    %1968 = vmatprep.subr.mxu0 0.0
    %1969 = vmatpush1.msra.mxu0 %v1907
    %1970 = vmatprep.subr.mxu0 0.0
    %1971 = vmatpush1.msra.mxu0 %v1908
    %1972 = vmatprep.subr.mxu0 0.0
    %1973 = vmatpush1.msra.mxu0 %v1909
    %1974 = vmatprep.subr.mxu0 0.0
    %1975 = vmatpush1.msra.mxu0 %v1910
    %1976 = vmatprep.subr.mxu0 0.0
    %1977 = vmatpush1.msra.mxu0 %v1911
    %1978 = vmatprep.subr.mxu0 0.0
    %1979 = vmatpush1.msra.mxu0 %v1912
    %1980 = vmatprep.subr.mxu0 0.0
    %1981 = vmatpush1.msra.mxu0 %v1913
    %1982 = vmatprep.subr.mxu0 0.0
    %1983 = vmatpush1.msra.mxu0 %v1914
    %1984 = vmatprep.subr.mxu0 0.0
    %1985 = vmatpush1.msra.mxu0 %v1915
    %1986 = vmatprep.subr.mxu0 0.0
    %1987 = vmatpush1.msra.mxu0 %v1916
    %1988 = vmatprep.subr.mxu0 0.0
    %1989 = vmatpush1.msra.mxu0 %v1917
    %1990 = vmatprep.subr.mxu0 0.0
    %1991 = vmatpush1.msra.mxu0 %v1918
    %1992 = vmatprep.subr.mxu0 0.0
    %1993 = vmatpush1.msra.mxu0 %v1919
    %1994 = vmatprep.subr.mxu0 0.0
    %1995 = vmatpush1.msra.mxu0 %v1920
    %1996 = vmatprep.subr.mxu0 0.0
    %1997 = vmatpush1.msra.mxu0 %v1921
    %1998 = vmatprep.mubr.f32.mxu0 %v1931
    %1999 = vmatmul.mubr.f32.gmra.mrb[0].mxu0 %v1927
    %v2000 = vpop.f32.mrb[0].mxu0
    %v2001 = vadd.f32 %v1922, %v2000
    %v2002 = vpop.f32.mrb[0].mxu0
    %2003 = vdwg.mxu0
    %2004 = vst.msk [vmem:[#allocation4 + $0x1] sm:$0x1] %vm1055, %v2001
    // Predicated region
    $region94: #{forward_pallas.1} parent=1 // pred_check
      _
    $region95: #{forward_pallas.1} parent=1 // pred_check_branch
      %2006 = sbr.rel (0) target = $region97
    $region96: #{forward_pallas.1} parent=1 // pred_region
      %s2008 = ssub.s32 32, 32
      %2009 = vsyncadd [#allocation5], %s2008
      %s2011 = sshll.u32 [#allocation4], 4
      %s2012 = int_to_ptr.vmem [resolvable:$true] %s2011
      %2014 = dma.vmem_to_hbm [thread:$0]  %s2012, 32, %s23, [#allocation5]
    $region97: #{forward_pallas.1} parent=1 // pred_fallthru
      _
    // Predicated region
    $region98: #{forward_pallas.1} parent=1 // pred_check
      _
    $region99: #{forward_pallas.1} parent=1 // pred_check_branch
      %2016 = sbr.rel (0) target = $region101
    $region100: #{forward_pallas.1} parent=1 // pred_region
      %2017 = dma.done [#allocation5], 32
    $region101: #{forward_pallas.1} parent=1 // pred_fallthru
      _
    %2018 = vsyncpa [#allocation5], 1

</llo_original>
